<compile_context>
chip_gen: v6e
topology: v6e:2x2x1
jax: 0.10.0
libtpu: 0.0.40
codegen_flags: <defaults>
</compile_context>

<pallas_src>
import jax
import jax.numpy as jnp
from jax.experimental import pallas as pl
from jax.experimental.pallas import tpu as pltpu


def _conv3x3_bn_relu(src, pad_ref, w_ref, scale_ref, bias_ref):
    """Conv3x3 (replicate pad) -> folded BN (eval) -> ReLU.

    src:        (H, W, C)     f32 activation.
    pad_ref:    (H+2, W+2, C) f32 VMEM scratch for the replicate-padded tile.
    w_ref:      (9*C, Cout)   bf16 weights (3x3 taps flattened into K, (dy,dx,c)).
    scale/bias: (1, Cout)     f32 folded BatchNorm.
    returns     (H*W, Cout)   f32.
    """
    H, W, C = src.shape

    # Replicate pad, written once into the scratch (no concatenate copies).
    pad_ref[pl.ds(1, H), pl.ds(1, W), :] = src
    pad_ref[pl.ds(0, 1), pl.ds(1, W), :] = src[0:1]
    pad_ref[pl.ds(H + 1, 1), pl.ds(1, W), :] = src[H - 1:H]
    # Column replication last: also fills the four corners correctly.
    pad_ref[:, pl.ds(0, 1), :] = pad_ref[:, pl.ds(1, 1), :]
    pad_ref[:, pl.ds(W + 1, 1), :] = pad_ref[:, pl.ds(W, 1), :]

    # im2col: one deep-K (K = 9*C) MXU matmul instead of 9 shallow ones.
    # Tap order (dy-major, dx, c) matches the (3,3,Cin,Cout)->(9C,Cout) weight
    # flattening in the wrapper.
    patches = jnp.concatenate(
        [pad_ref[pl.ds(dy, H), pl.ds(dx, W), :]
         for dy in range(3) for dx in range(3)],
        axis=-1).reshape(H * W, 9 * C)
    acc = jnp.dot(patches.astype(jnp.bfloat16), w_ref[...],
                  preferred_element_type=jnp.float32)          # (H*W, Cout) f32
    return jnp.maximum(acc * scale_ref[...] + bias_ref[...], 0.0)


def down_kernel(x_ref, w1_ref, s1_ref, b1_ref, w2_ref, s2_ref, b2_ref,
                o_ref, pad1_ref, pad2_ref):
    # x_ref: (H, W2, 2*Cin) -- adjacent input-column pairs were folded into the
    # lane dim by a free row-major reshape in the wrapper.
    H, W2, C2 = x_ref.shape
    Cin = C2 // 2
    H2 = H // 2
    Cout = w1_ref.shape[-1]

    # --- MaxPool2d(2): max over the column pair (lane halves), then row pair.
    x = x_ref[...]
    colmax = jnp.maximum(x[..., :Cin], x[..., Cin:])           # (H, W2, Cin)
    colmax = colmax.reshape(H2, 2, W2, Cin)                    # leading-dim split
    pooled = jnp.maximum(colmax[:, 0], colmax[:, 1])           # (H2, W2, Cin)

    # --- DoubleConv --------------------------------------------------------
    y = _conv3x3_bn_relu(pooled, pad1_ref, w1_ref, s1_ref, b1_ref)
    y = y.reshape(H2, W2, Cout)
    z = _conv3x3_bn_relu(y, pad2_ref, w2_ref, s2_ref, b2_ref)  # (H2*W2, Cout)
    o_ref[...] = z.astype(o_ref.dtype)


def down_pallas(x_nchw, w1_hwio, s1, b1, w2_hwio, s2, b2):
    N, Cin, H, W = x_nchw.shape
    H2, W2 = H // 2, W // 2                 # MaxPool2d(2) floors odd dims
    Cout = w1_hwio.shape[-1]

    # NCHW -> NHWC (channels on lanes), then fold column pairs into the lane
    # dim; the reshape is a pure row-major reinterpretation (no data movement).
    # TODO(synk): drop the transpose pair if the surrounding network is NHWC.
    x = jnp.transpose(x_nchw[:, :, :2 * H2, :2 * W2], (0, 2, 3, 1))
    x = x.reshape(N, 2 * H2, W2, 2 * Cin)

    w1 = w1_hwio.reshape(9 * Cin, Cout).astype(jnp.bfloat16)
    w2 = w2_hwio.reshape(9 * Cout, Cout).astype(jnp.bfloat16)

    flops = 2 * N * H2 * W2 * 9 * Cout * (Cin + Cout)
    bytes_accessed = (4 * x.size + 4 * N * H2 * W2 * Cout
                      + 2 * (w1.size + w2.size)
                      + 4 * (s1.size + b1.size + s2.size + b2.size))

    def const_spec(shape):  # blocks whose index never changes: single-buffer
        return pl.BlockSpec(shape, lambda n: (0,) * len(shape),
                            pipeline_mode=pl.Buffered(1))

    out_flat = pl.pallas_call(
        down_kernel,
        out_shape=jax.ShapeDtypeStruct((N, H2 * W2, Cout), jnp.float32),
        grid_spec=pltpu.PrefetchScalarGridSpec(
            num_scalar_prefetch=0,
            grid=(N,),
            in_specs=[
                pl.BlockSpec((None, 2 * H2, W2, 2 * Cin),
                             lambda n: (n, 0, 0, 0)),
                const_spec((9 * Cin, Cout)),
                const_spec((1, Cout)),
                const_spec((1, Cout)),
                const_spec((9 * Cout, Cout)),
                const_spec((1, Cout)),
                const_spec((1, Cout)),
            ],
            out_specs=pl.BlockSpec((None, H2 * W2, Cout), lambda n: (n, 0, 0)),
            scratch_shapes=[
                pltpu.VMEM((H2 + 2, W2 + 2, Cin), jnp.float32),
                pltpu.VMEM((H2 + 2, W2 + 2, Cout), jnp.float32),
            ],
        ),
        compiler_params=pltpu.CompilerParams(
            dimension_semantics=("parallel",),
            vmem_limit_bytes=32 * 1024 * 1024,
        ),
        cost_estimate=pl.CostEstimate(flops=flops, transcendentals=0,
                                      bytes_accessed=bytes_accessed),
    )(x, w1, s1, b1, w2, s2, b2)

    out_nhwc = out_flat.reshape(N, H2, W2, Cout)
    return jnp.transpose(out_nhwc, (0, 3, 1, 2))   # back to NCHW


def down_reference(x_nchw, w1_hwio, s1, b1, w2_hwio, s2, b2):
    """Pure-JAX reference (XLA conv) using the same bf16-rounded matmul inputs."""
    x = jnp.transpose(x_nchw, (0, 2, 3, 1))
    p = jax.lax.reduce_window(x, -jnp.inf, jax.lax.max,
                              (1, 2, 2, 1), (1, 2, 2, 1), 'VALID')

    def conv(t, w, s, b):
        tp = jnp.pad(t.astype(jnp.bfloat16),
                     ((0, 0), (1, 1), (1, 1), (0, 0)), mode='edge')
        y = jax.lax.conv_general_dilated(
            tp, w.astype(jnp.bfloat16), (1, 1), 'VALID',
            dimension_numbers=('NHWC', 'HWIO', 'NHWC'),
            preferred_element_type=jnp.float32)
        return jnp.maximum(y * s.reshape(-1) + b.reshape(-1), 0.0)

    y = conv(p, w1_hwio, s1, b1)
    z = conv(y, w2_hwio, s2, b2)
    return jnp.transpose(z, (0, 3, 1, 2))


def make_layer_params(key, cin, cout):
    """Deterministic Conv2d + BatchNorm2d(eval) params, BN folded into scale/bias."""
    kk = jax.random.split(key, 6)
    w_oihw = jax.random.normal(kk[0], (cout, cin, 3, 3), jnp.float32) * ((cin * 9) ** -0.5)
    b_conv = jax.random.normal(kk[1], (cout,), jnp.float32) * 0.1
    gamma = jax.random.uniform(kk[2], (cout,), jnp.float32, 0.5, 1.5)
    beta = jax.random.normal(kk[3], (cout,), jnp.float32) * 0.1
    r_mean = jax.random.normal(kk[4], (cout,), jnp.float32) * 0.1
    r_var = jax.random.uniform(kk[5], (cout,), jnp.float32, 0.5, 1.5)
    inv_std = 1.0 / jnp.sqrt(r_var + 1e-5)
    scale = gamma * inv_std
    bias = beta + (b_conv - r_mean) * scale
    w_hwio = jnp.transpose(w_oihw, (2, 3, 1, 0))   # (3,3,Cin,Cout)
    return w_hwio, scale.reshape(1, cout), bias.reshape(1, cout)


if __name__ == "__main__":
    N, Cin, Cout, H, W = 2, 4, 8, 16, 16
    key = jax.random.PRNGKey(0)
    k_x, k_l1, k_l2 = jax.random.split(key, 3)

    x = jax.random.normal(k_x, (N, Cin, H, W), jnp.float32)
    w1, s1, b1 = make_layer_params(k_l1, Cin, Cout)
    w2, s2, b2 = make_layer_params(k_l2, Cout, Cout)

    out = jax.block_until_ready(down_pallas(x, w1, s1, b1, w2, s2, b2))
    ref = down_reference(x, w1, s1, b1, w2, s2, b2)

    assert out.shape == (N, Cout, H // 2, W // 2), out.shape
    max_err = float(jnp.max(jnp.abs(out - ref)))
    # bf16 MXU matmuls: the reference uses the same bf16-rounded operands, so
    # residual differences are only f32 summation-order noise.
    assert jnp.allclose(out, ref, atol=2e-2, rtol=2e-2), f"max abs err {max_err}"
    print("KERNEL_OK")
</pallas_src>

<mosaic_0001>
module attributes {stable_mosaic.version = 11 : i64} {
  func.func @down_kernel(%arg0: i32, %arg1: memref<1x16x8x8xf32, #tpu.memory_space<vmem>>, %arg2: memref<36x8xbf16, #tpu.memory_space<vmem>>, %arg3: memref<1x8xf32, #tpu.memory_space<vmem>>, %arg4: memref<1x8xf32, #tpu.memory_space<vmem>>, %arg5: memref<72x8xbf16, #tpu.memory_space<vmem>>, %arg6: memref<1x8xf32, #tpu.memory_space<vmem>>, %arg7: memref<1x8xf32, #tpu.memory_space<vmem>>, %arg8: memref<1x64x8xf32, #tpu.memory_space<vmem>>, %arg9: memref<10x10x4xf32, #tpu.memory_space<vmem>>, %arg10: memref<10x10x8xf32, #tpu.memory_space<vmem>>) attributes {dimension_semantics = [#tpu.dimension_semantics<parallel>], iteration_bounds = array<i64: 2>, scalar_prefetch = 0 : i64, scratch_operands = 2 : i64, tpu.core_type = #tpu.core_type<tc>, window_params = [{transform_indices = @transform_0, window_bounds = array<i64: 1, 16, 8, 8>}, {pipeline_mode = #tpu.pipeline_mode<synchronous>, transform_indices = @transform_1, window_bounds = array<i64: 36, 8>}, {pipeline_mode = #tpu.pipeline_mode<synchronous>, transform_indices = @transform_2, window_bounds = array<i64: 1, 8>}, {pipeline_mode = #tpu.pipeline_mode<synchronous>, transform_indices = @transform_3, window_bounds = array<i64: 1, 8>}, {pipeline_mode = #tpu.pipeline_mode<synchronous>, transform_indices = @transform_4, window_bounds = array<i64: 72, 8>}, {pipeline_mode = #tpu.pipeline_mode<synchronous>, transform_indices = @transform_5, window_bounds = array<i64: 1, 8>}, {pipeline_mode = #tpu.pipeline_mode<synchronous>, transform_indices = @transform_6, window_bounds = array<i64: 1, 8>}, {transform_indices = @transform_7, window_bounds = array<i64: 1, 64, 8>}]} {
    %c0 = arith.constant 0 : index
    %c0_0 = arith.constant 0 : index
    %c0_1 = arith.constant 0 : index
    %c0_2 = arith.constant 0 : index
    %0 = vector.load %arg1[%c0, %c0_0, %c0_1, %c0_2] : memref<1x16x8x8xf32, #tpu.memory_space<vmem>>, vector<1x16x8x8xf32>
    %1 = vector.shape_cast %0 : vector<1x16x8x8xf32> to vector<16x8x8xf32>
    %2 = vector.extract_strided_slice %1 {offsets = [0, 0, 0], sizes = [16, 8, 4], strides = [1, 1, 1]} : vector<16x8x8xf32> to vector<16x8x4xf32>
    %3 = vector.extract_strided_slice %1 {offsets = [0, 0, 4], sizes = [16, 8, 4], strides = [1, 1, 1]} : vector<16x8x8xf32> to vector<16x8x4xf32>
    %4 = arith.maximumf %2, %3 : vector<16x8x4xf32>
    %5 = vector.shape_cast %4 : vector<16x8x4xf32> to vector<8x2x8x4xf32>
    %6 = vector.extract_strided_slice %5 {offsets = [0, 0, 0, 0], sizes = [8, 1, 8, 4], strides = [1, 1, 1, 1]} : vector<8x2x8x4xf32> to vector<8x1x8x4xf32>
    %7 = vector.shape_cast %6 : vector<8x1x8x4xf32> to vector<8x8x4xf32>
    %8 = vector.extract_strided_slice %5 {offsets = [0, 1, 0, 0], sizes = [8, 1, 8, 4], strides = [1, 1, 1, 1]} : vector<8x2x8x4xf32> to vector<8x1x8x4xf32>
    %9 = vector.shape_cast %8 : vector<8x1x8x4xf32> to vector<8x8x4xf32>
    %10 = arith.maximumf %7, %9 : vector<8x8x4xf32>
    %c1 = arith.constant 1 : index
    %c1_3 = arith.constant 1 : index
    %c0_4 = arith.constant 0 : index
    %11 = vector.load %arg9[%c1, %c1_3, %c0_4] : memref<10x10x4xf32, #tpu.memory_space<vmem>>, vector<8x8x4xf32>
    tpu.vector_store %arg9[%c1, %c1_3, %c0_4], %10 {strides = array<i32>} : memref<10x10x4xf32, #tpu.memory_space<vmem>>, vector<8x8x4xf32>,
    %12 = vector.extract_strided_slice %10 {offsets = [0, 0, 0], sizes = [1, 8, 4], strides = [1, 1, 1]} : vector<8x8x4xf32> to vector<1x8x4xf32>
    %c0_5 = arith.constant 0 : index
    %c1_6 = arith.constant 1 : index
    %c0_7 = arith.constant 0 : index
    %13 = vector.load %arg9[%c0_5, %c1_6, %c0_7] : memref<10x10x4xf32, #tpu.memory_space<vmem>>, vector<1x8x4xf32>
    tpu.vector_store %arg9[%c0_5, %c1_6, %c0_7], %12 {strides = array<i32>} : memref<10x10x4xf32, #tpu.memory_space<vmem>>, vector<1x8x4xf32>,
    %14 = vector.extract_strided_slice %10 {offsets = [7, 0, 0], sizes = [1, 8, 4], strides = [1, 1, 1]} : vector<8x8x4xf32> to vector<1x8x4xf32>
    %c9 = arith.constant 9 : index
    %c1_8 = arith.constant 1 : index
    %c0_9 = arith.constant 0 : index
    %15 = vector.load %arg9[%c9, %c1_8, %c0_9] : memref<10x10x4xf32, #tpu.memory_space<vmem>>, vector<1x8x4xf32>
    tpu.vector_store %arg9[%c9, %c1_8, %c0_9], %14 {strides = array<i32>} : memref<10x10x4xf32, #tpu.memory_space<vmem>>, vector<1x8x4xf32>,
    %c0_10 = arith.constant 0 : index
    %c1_11 = arith.constant 1 : index
    %c0_12 = arith.constant 0 : index
    %16 = vector.load %arg9[%c0_10, %c1_11, %c0_12] : memref<10x10x4xf32, #tpu.memory_space<vmem>>, vector<10x1x4xf32>
    %c0_13 = arith.constant 0 : index
    %c0_14 = arith.constant 0 : index
    %c0_15 = arith.constant 0 : index
    %17 = vector.load %arg9[%c0_13, %c0_14, %c0_15] : memref<10x10x4xf32, #tpu.memory_space<vmem>>, vector<10x1x4xf32>
    tpu.vector_store %arg9[%c0_13, %c0_14, %c0_15], %16 {strides = array<i32>} : memref<10x10x4xf32, #tpu.memory_space<vmem>>, vector<10x1x4xf32>,
    %c0_16 = arith.constant 0 : index
    %c8 = arith.constant 8 : index
    %c0_17 = arith.constant 0 : index
    %18 = vector.load %arg9[%c0_16, %c8, %c0_17] : memref<10x10x4xf32, #tpu.memory_space<vmem>>, vector<10x1x4xf32>
    %c0_18 = arith.constant 0 : index
    %c9_19 = arith.constant 9 : index
    %c0_20 = arith.constant 0 : index
    %19 = vector.load %arg9[%c0_18, %c9_19, %c0_20] : memref<10x10x4xf32, #tpu.memory_space<vmem>>, vector<10x1x4xf32>
    tpu.vector_store %arg9[%c0_18, %c9_19, %c0_20], %18 {strides = array<i32>} : memref<10x10x4xf32, #tpu.memory_space<vmem>>, vector<10x1x4xf32>,
    %c0_21 = arith.constant 0 : index
    %c0_22 = arith.constant 0 : index
    %c0_23 = arith.constant 0 : index
    %20 = vector.load %arg9[%c0_21, %c0_22, %c0_23] : memref<10x10x4xf32, #tpu.memory_space<vmem>>, vector<8x8x4xf32>
    %c0_24 = arith.constant 0 : index
    %c1_25 = arith.constant 1 : index
    %c0_26 = arith.constant 0 : index
    %21 = vector.load %arg9[%c0_24, %c1_25, %c0_26] : memref<10x10x4xf32, #tpu.memory_space<vmem>>, vector<8x8x4xf32>
    %c0_27 = arith.constant 0 : index
    %c2 = arith.constant 2 : index
    %c0_28 = arith.constant 0 : index
    %22 = vector.load %arg9[%c0_27, %c2, %c0_28] : memref<10x10x4xf32, #tpu.memory_space<vmem>>, vector<8x8x4xf32>
    %c1_29 = arith.constant 1 : index
    %c0_30 = arith.constant 0 : index
    %c0_31 = arith.constant 0 : index
    %23 = vector.load %arg9[%c1_29, %c0_30, %c0_31] : memref<10x10x4xf32, #tpu.memory_space<vmem>>, vector<8x8x4xf32>
    %c1_32 = arith.constant 1 : index
    %c1_33 = arith.constant 1 : index
    %c0_34 = arith.constant 0 : index
    %24 = vector.load %arg9[%c1_32, %c1_33, %c0_34] : memref<10x10x4xf32, #tpu.memory_space<vmem>>, vector<8x8x4xf32>
    %c1_35 = arith.constant 1 : index
    %c2_36 = arith.constant 2 : index
    %c0_37 = arith.constant 0 : index
    %25 = vector.load %arg9[%c1_35, %c2_36, %c0_37] : memref<10x10x4xf32, #tpu.memory_space<vmem>>, vector<8x8x4xf32>
    %c2_38 = arith.constant 2 : index
    %c0_39 = arith.constant 0 : index
    %c0_40 = arith.constant 0 : index
    %26 = vector.load %arg9[%c2_38, %c0_39, %c0_40] : memref<10x10x4xf32, #tpu.memory_space<vmem>>, vector<8x8x4xf32>
    %c2_41 = arith.constant 2 : index
    %c1_42 = arith.constant 1 : index
    %c0_43 = arith.constant 0 : index
    %27 = vector.load %arg9[%c2_41, %c1_42, %c0_43] : memref<10x10x4xf32, #tpu.memory_space<vmem>>, vector<8x8x4xf32>
    %c2_44 = arith.constant 2 : index
    %c2_45 = arith.constant 2 : index
    %c0_46 = arith.constant 0 : index
    %28 = vector.load %arg9[%c2_44, %c2_45, %c0_46] : memref<10x10x4xf32, #tpu.memory_space<vmem>>, vector<8x8x4xf32>
    %29 = tpu.concatenate %20, %21, %22, %23, %24, %25, %26, %27, %28 in 2 : vector<8x8x4xf32>, vector<8x8x4xf32>, vector<8x8x4xf32>, vector<8x8x4xf32>, vector<8x8x4xf32>, vector<8x8x4xf32>, vector<8x8x4xf32>, vector<8x8x4xf32>, vector<8x8x4xf32> -> vector<8x8x36xf32>
    %30 = vector.shape_cast %29 : vector<8x8x36xf32> to vector<64x36xf32>
    %31 = arith.truncf %30 : vector<64x36xf32> to vector<64x36xbf16>
    %c0_47 = arith.constant 0 : index
    %c0_48 = arith.constant 0 : index
    %32 = vector.load %arg2[%c0_47, %c0_48] : memref<36x8xbf16, #tpu.memory_space<vmem>>, vector<36x8xbf16>
    %cst = arith.constant dense<0.000000e+00> : vector<64x8xf32>
    %33 = tpu.matmul %31, %32, %cst {dimension_numbers = #tpu.dot_dimension_numbers<[1], [0], [0], [1], [0, 0, 1, 1], [], []>} : vector<64x36xbf16>, vector<36x8xbf16>, vector<64x8xf32> -> vector<64x8xf32>
    %c0_49 = arith.constant 0 : index
    %c0_50 = arith.constant 0 : index
    %34 = vector.load %arg3[%c0_49, %c0_50] : memref<1x8xf32, #tpu.memory_space<vmem>>, vector<1x8xf32>
    %35 = vector.broadcast %34 : vector<1x8xf32> to vector<64x8xf32>
    %36 = arith.mulf %33, %35 : vector<64x8xf32>
    %c0_51 = arith.constant 0 : index
    %c0_52 = arith.constant 0 : index
    %37 = vector.load %arg4[%c0_51, %c0_52] : memref<1x8xf32, #tpu.memory_space<vmem>>, vector<1x8xf32>
    %38 = vector.broadcast %37 : vector<1x8xf32> to vector<64x8xf32>
    %39 = arith.addf %36, %38 : vector<64x8xf32>
    %cst_53 = arith.constant 0.000000e+00 : f32
    %40 = vector.broadcast %cst_53 : f32 to vector<64x8xf32>
    %41 = arith.maximumf %39, %40 : vector<64x8xf32>
    %42 = vector.shape_cast %41 : vector<64x8xf32> to vector<8x8x8xf32>
    %c1_54 = arith.constant 1 : index
    %c1_55 = arith.constant 1 : index
    %c0_56 = arith.constant 0 : index
    %43 = vector.load %arg10[%c1_54, %c1_55, %c0_56] : memref<10x10x8xf32, #tpu.memory_space<vmem>>, vector<8x8x8xf32>
    tpu.vector_store %arg10[%c1_54, %c1_55, %c0_56], %42 {strides = array<i32>} : memref<10x10x8xf32, #tpu.memory_space<vmem>>, vector<8x8x8xf32>,
    %44 = vector.extract_strided_slice %42 {offsets = [0, 0, 0], sizes = [1, 8, 8], strides = [1, 1, 1]} : vector<8x8x8xf32> to vector<1x8x8xf32>
    %c0_57 = arith.constant 0 : index
    %c1_58 = arith.constant 1 : index
    %c0_59 = arith.constant 0 : index
    %45 = vector.load %arg10[%c0_57, %c1_58, %c0_59] : memref<10x10x8xf32, #tpu.memory_space<vmem>>, vector<1x8x8xf32>
    tpu.vector_store %arg10[%c0_57, %c1_58, %c0_59], %44 {strides = array<i32>} : memref<10x10x8xf32, #tpu.memory_space<vmem>>, vector<1x8x8xf32>,
    %46 = vector.extract_strided_slice %42 {offsets = [7, 0, 0], sizes = [1, 8, 8], strides = [1, 1, 1]} : vector<8x8x8xf32> to vector<1x8x8xf32>
    %c9_60 = arith.constant 9 : index
    %c1_61 = arith.constant 1 : index
    %c0_62 = arith.constant 0 : index
    %47 = vector.load %arg10[%c9_60, %c1_61, %c0_62] : memref<10x10x8xf32, #tpu.memory_space<vmem>>, vector<1x8x8xf32>
    tpu.vector_store %arg10[%c9_60, %c1_61, %c0_62], %46 {strides = array<i32>} : memref<10x10x8xf32, #tpu.memory_space<vmem>>, vector<1x8x8xf32>,
    %c0_63 = arith.constant 0 : index
    %c1_64 = arith.constant 1 : index
    %c0_65 = arith.constant 0 : index
    %48 = vector.load %arg10[%c0_63, %c1_64, %c0_65] : memref<10x10x8xf32, #tpu.memory_space<vmem>>, vector<10x1x8xf32>
    %c0_66 = arith.constant 0 : index
    %c0_67 = arith.constant 0 : index
    %c0_68 = arith.constant 0 : index
    %49 = vector.load %arg10[%c0_66, %c0_67, %c0_68] : memref<10x10x8xf32, #tpu.memory_space<vmem>>, vector<10x1x8xf32>
    tpu.vector_store %arg10[%c0_66, %c0_67, %c0_68], %48 {strides = array<i32>} : memref<10x10x8xf32, #tpu.memory_space<vmem>>, vector<10x1x8xf32>,
    %c0_69 = arith.constant 0 : index
    %c8_70 = arith.constant 8 : index
    %c0_71 = arith.constant 0 : index
    %50 = vector.load %arg10[%c0_69, %c8_70, %c0_71] : memref<10x10x8xf32, #tpu.memory_space<vmem>>, vector<10x1x8xf32>
    %c0_72 = arith.constant 0 : index
    %c9_73 = arith.constant 9 : index
    %c0_74 = arith.constant 0 : index
    %51 = vector.load %arg10[%c0_72, %c9_73, %c0_74] : memref<10x10x8xf32, #tpu.memory_space<vmem>>, vector<10x1x8xf32>
    tpu.vector_store %arg10[%c0_72, %c9_73, %c0_74], %50 {strides = array<i32>} : memref<10x10x8xf32, #tpu.memory_space<vmem>>, vector<10x1x8xf32>,
    %c0_75 = arith.constant 0 : index
    %c0_76 = arith.constant 0 : index
    %c0_77 = arith.constant 0 : index
    %52 = vector.load %arg10[%c0_75, %c0_76, %c0_77] : memref<10x10x8xf32, #tpu.memory_space<vmem>>, vector<8x8x8xf32>
    %c0_78 = arith.constant 0 : index
    %c1_79 = arith.constant 1 : index
    %c0_80 = arith.constant 0 : index
    %53 = vector.load %arg10[%c0_78, %c1_79, %c0_80] : memref<10x10x8xf32, #tpu.memory_space<vmem>>, vector<8x8x8xf32>
    %c0_81 = arith.constant 0 : index
    %c2_82 = arith.constant 2 : index
    %c0_83 = arith.constant 0 : index
    %54 = vector.load %arg10[%c0_81, %c2_82, %c0_83] : memref<10x10x8xf32, #tpu.memory_space<vmem>>, vector<8x8x8xf32>
    %c1_84 = arith.constant 1 : index
    %c0_85 = arith.constant 0 : index
    %c0_86 = arith.constant 0 : index
    %55 = vector.load %arg10[%c1_84, %c0_85, %c0_86] : memref<10x10x8xf32, #tpu.memory_space<vmem>>, vector<8x8x8xf32>
    %c1_87 = arith.constant 1 : index
    %c1_88 = arith.constant 1 : index
    %c0_89 = arith.constant 0 : index
    %56 = vector.load %arg10[%c1_87, %c1_88, %c0_89] : memref<10x10x8xf32, #tpu.memory_space<vmem>>, vector<8x8x8xf32>
    %c1_90 = arith.constant 1 : index
    %c2_91 = arith.constant 2 : index
    %c0_92 = arith.constant 0 : index
    %57 = vector.load %arg10[%c1_90, %c2_91, %c0_92] : memref<10x10x8xf32, #tpu.memory_space<vmem>>, vector<8x8x8xf32>
    %c2_93 = arith.constant 2 : index
    %c0_94 = arith.constant 0 : index
    %c0_95 = arith.constant 0 : index
    %58 = vector.load %arg10[%c2_93, %c0_94, %c0_95] : memref<10x10x8xf32, #tpu.memory_space<vmem>>, vector<8x8x8xf32>
    %c2_96 = arith.constant 2 : index
    %c1_97 = arith.constant 1 : index
    %c0_98 = arith.constant 0 : index
    %59 = vector.load %arg10[%c2_96, %c1_97, %c0_98] : memref<10x10x8xf32, #tpu.memory_space<vmem>>, vector<8x8x8xf32>
    %c2_99 = arith.constant 2 : index
    %c2_100 = arith.constant 2 : index
    %c0_101 = arith.constant 0 : index
    %60 = vector.load %arg10[%c2_99, %c2_100, %c0_101] : memref<10x10x8xf32, #tpu.memory_space<vmem>>, vector<8x8x8xf32>
    %61 = tpu.concatenate %52, %53, %54, %55, %56, %57, %58, %59, %60 in 2 : vector<8x8x8xf32>, vector<8x8x8xf32>, vector<8x8x8xf32>, vector<8x8x8xf32>, vector<8x8x8xf32>, vector<8x8x8xf32>, vector<8x8x8xf32>, vector<8x8x8xf32>, vector<8x8x8xf32> -> vector<8x8x72xf32>
    %62 = vector.shape_cast %61 : vector<8x8x72xf32> to vector<64x72xf32>
    %63 = arith.truncf %62 : vector<64x72xf32> to vector<64x72xbf16>
    %c0_102 = arith.constant 0 : index
    %c0_103 = arith.constant 0 : index
    %64 = vector.load %arg5[%c0_102, %c0_103] : memref<72x8xbf16, #tpu.memory_space<vmem>>, vector<72x8xbf16>
    %cst_104 = arith.constant dense<0.000000e+00> : vector<64x8xf32>
    %65 = tpu.matmul %63, %64, %cst_104 {dimension_numbers = #tpu.dot_dimension_numbers<[1], [0], [0], [1], [0, 0, 1, 1], [], []>} : vector<64x72xbf16>, vector<72x8xbf16>, vector<64x8xf32> -> vector<64x8xf32>
    %c0_105 = arith.constant 0 : index
    %c0_106 = arith.constant 0 : index
    %66 = vector.load %arg6[%c0_105, %c0_106] : memref<1x8xf32, #tpu.memory_space<vmem>>, vector<1x8xf32>
    %67 = vector.broadcast %66 : vector<1x8xf32> to vector<64x8xf32>
    %68 = arith.mulf %65, %67 : vector<64x8xf32>
    %c0_107 = arith.constant 0 : index
    %c0_108 = arith.constant 0 : index
    %69 = vector.load %arg7[%c0_107, %c0_108] : memref<1x8xf32, #tpu.memory_space<vmem>>, vector<1x8xf32>
    %70 = vector.broadcast %69 : vector<1x8xf32> to vector<64x8xf32>
    %71 = arith.addf %68, %70 : vector<64x8xf32>
    %cst_109 = arith.constant 0.000000e+00 : f32
    %72 = vector.broadcast %cst_109 : f32 to vector<64x8xf32>
    %73 = arith.maximumf %71, %72 : vector<64x8xf32>
    %c0_110 = arith.constant 0 : index
    %c0_111 = arith.constant 0 : index
    %c0_112 = arith.constant 0 : index
    %74 = vector.load %arg8[%c0_110, %c0_111, %c0_112] : memref<1x64x8xf32, #tpu.memory_space<vmem>>, vector<1x64x8xf32>
    %75 = vector.shape_cast %74 : vector<1x64x8xf32> to vector<64x8xf32>
    %76 = vector.shape_cast %73 : vector<64x8xf32> to vector<1x64x8xf32>
    tpu.vector_store %arg8[%c0_110, %c0_111, %c0_112], %76 {strides = array<i32>} : memref<1x64x8xf32, #tpu.memory_space<vmem>>, vector<1x64x8xf32>,
    return
  }
  func.func @transform_0(%arg0: i32) -> (i32, i32, i32, i32) {
    %c0_i32 = arith.constant 0 : i32
    %c0_i32_0 = arith.constant 0 : i32
    %c0_i32_1 = arith.constant 0 : i32
    %c0_i32_2 = arith.constant 0 : i32
    return %arg0, %c0_i32, %c0_i32_0, %c0_i32_1 : i32, i32, i32, i32
  }
  func.func @transform_1(%arg0: i32) -> (i32, i32) {
    %c0_i32 = arith.constant 0 : i32
    %c0_i32_0 = arith.constant 0 : i32
    %c0_i32_1 = arith.constant 0 : i32
    return %c0_i32, %c0_i32_0 : i32, i32
  }
  func.func @transform_2(%arg0: i32) -> (i32, i32) {
    %c0_i32 = arith.constant 0 : i32
    %c0_i32_0 = arith.constant 0 : i32
    %c0_i32_1 = arith.constant 0 : i32
    return %c0_i32, %c0_i32_0 : i32, i32
  }
  func.func @transform_3(%arg0: i32) -> (i32, i32) {
    %c0_i32 = arith.constant 0 : i32
    %c0_i32_0 = arith.constant 0 : i32
    %c0_i32_1 = arith.constant 0 : i32
    return %c0_i32, %c0_i32_0 : i32, i32
  }
  func.func @transform_4(%arg0: i32) -> (i32, i32) {
    %c0_i32 = arith.constant 0 : i32
    %c0_i32_0 = arith.constant 0 : i32
    %c0_i32_1 = arith.constant 0 : i32
    return %c0_i32, %c0_i32_0 : i32, i32
  }
  func.func @transform_5(%arg0: i32) -> (i32, i32) {
    %c0_i32 = arith.constant 0 : i32
    %c0_i32_0 = arith.constant 0 : i32
    %c0_i32_1 = arith.constant 0 : i32
    return %c0_i32, %c0_i32_0 : i32, i32
  }
  func.func @transform_6(%arg0: i32) -> (i32, i32) {
    %c0_i32 = arith.constant 0 : i32
    %c0_i32_0 = arith.constant 0 : i32
    %c0_i32_1 = arith.constant 0 : i32
    return %c0_i32, %c0_i32_0 : i32, i32
  }
  func.func @transform_7(%arg0: i32) -> (i32, i32, i32) {
    %c0_i32 = arith.constant 0 : i32
    %c0_i32_0 = arith.constant 0 : i32
    %c0_i32_1 = arith.constant 0 : i32
    return %arg0, %c0_i32, %c0_i32_0 : i32, i32, i32
  }
}

</mosaic_0001>

<llo_original>
// kernel: tpu_custom_call.1
$region0: #{tpu_custom_call.1}
  #allocation0 [shape = 'u32[]', space=smem, size = 0x4, offset = 0x4, fixed_abs, tag = 'smem constant byte address 0x4 - core index']
  #allocation1 [shape = 'u32[144,128]{1,0:T(1,128)}', space=vmem, size = 0x12000, scoped, tag = 'internal scratch']
  #allocation2 [shape = 'f32[10,10,4]{2,1,0:T(8,128)}', space=vmem, size = 0x14000, scoped, tag = 'scratch operand']
  #allocation3 [shape = 'f32[10,10,8]{2,1,0:T(8,128)}', space=vmem, size = 0x14000, scoped, tag = 'scratch operand']
  %s0 = inlined_call_operand.vmem [shape: f32[2,16,8,8], index: 0, kind: input, shape index: {}]
  %s1 = inlined_call_operand.vmem [shape: bf16[36,8], index: 1, kind: input, shape index: {}]
  %s2 = inlined_call_operand.vmem [shape: f32[1,8], index: 2, kind: input, shape index: {}]
  %s3 = inlined_call_operand.vmem [shape: f32[1,8], index: 3, kind: input, shape index: {}]
  %s4 = inlined_call_operand.vmem [shape: bf16[72,8], index: 4, kind: input, shape index: {}]
  %s5 = inlined_call_operand.vmem [shape: f32[1,8], index: 5, kind: input, shape index: {}]
  %s6 = inlined_call_operand.vmem [shape: f32[1,8], index: 6, kind: input, shape index: {}]
  %s7 = inlined_call_operand.vmem [shape: f32[2,64,8], index: 7, kind: output, shape index: {}]
  %s8 = sld [smem:[#allocation0]]
  $region61: #{tpu_custom_call.1} parent=0
    _
  %s10 = ssub.s32 1, %s8
  %s11 = scalar_select 0, %s10, %s8
  loop: start=0, step=1, limit=4
  $region2: #{tpu_custom_call.1} parent=0 // loop_pre_header
    _
  $region3: #{tpu_custom_call.1} parent=0 // loop_header
    %s13 = sphi 0, %s17
    %p14 = scmp.ge.s32.totalorder %s13, 4
    %s23 = sphi 0, %s25
    %s26 = sphi 0, %s23
    %s27 = sphi 0, %s26
    %s43 = sphi 0, %s27
    %s47 = sphi 0, %s47
    %s49 = sphi 0, %s47
    %s50 = sphi 0, %s49
    %s64 = sphi 0, %s50
    %s68 = sphi 0, %s68
    %s70 = sphi 0, %s68
    %s71 = sphi 0, %s70
    %s85 = sphi 0, %s71
    %s89 = sphi 0, %s89
    %s91 = sphi 0, %s89
    %s92 = sphi 0, %s91
    %s106 = sphi 0, %s92
    %s110 = sphi 0, %s110
    %s112 = sphi 0, %s110
    %s113 = sphi 0, %s112
    %s127 = sphi 0, %s113
    %s131 = sphi 0, %s131
    %s133 = sphi 0, %s131
    %s134 = sphi 0, %s133
    %s148 = sphi 0, %s134
    %s152 = sphi 0, %s152
    %s154 = sphi 0, %s152
    %s155 = sphi 0, %s154
    %s169 = sphi 0, %s155
    %s175 = sphi 0, %s177
    %s178 = sphi 0, %s175
    %s179 = sphi 0, %s178
    %s195 = sphi 0, %s179
  $region4: #{tpu_custom_call.1} parent=0 // loop_header_branch
    %16 = sbr.rel (%p14) target = $region8
  $region5: #{tpu_custom_call.1} parent=0 // loop_body
    %s18 = ssub.s32 %s13, 1
    %s19 = ssub.s32 %s13, 2
    %s20 = sadd.s32 %s13, 1
    %s21 = ssub.s32 %s13, %s20
    %p22 = scmp.eq.s32.totalorder %s21, 0
    %s24 = sadd.s32 %s23, 1
    %s25 = scalar_select %p22, %s23, %s24
    %p28 = pneg %p22
    %p29 = scmp.eq.s32.totalorder %s13, 1
    %p30 = por %p28, %p29
    %p31 = scmp.ne.s32.totalorder %s23, %s26
    %p32 = scmp.eq.s32.totalorder %s13, 0
    %p33 = por %p31, %p32
    %p34 = scmp.ne.s32.totalorder %s23, %s26
    %p35 = scmp.eq.s32.totalorder %s18, 1
    %p36 = por %p34, %p35
    %p37 = scmp.ne.s32.totalorder %s26, %s27
    %p38 = scmp.eq.s32.totalorder %s18, 0
    %p39 = por %p37, %p38
    %p40 = scmp.ne.s32.totalorder %s26, %s27
    %p41 = scmp.eq.s32.totalorder %s19, 1
    %p42 = por %p40, %p41
    %p44 = scmp.ne.s32.totalorder %s27, %s43
    %p45 = scmp.eq.s32.totalorder %s19, 0
    %p46 = por %p44, %p45
    %s48 = sadd.s32 %s47, 1
    %p51 = scmp.eq.s32.totalorder %s13, 1
    %p52 = scmp.ne.s32.totalorder %s47, %s49
    %p53 = scmp.eq.s32.totalorder %s13, 0
    %p54 = por %p52, %p53
    %p55 = scmp.ne.s32.totalorder %s47, %s49
    %p56 = scmp.eq.s32.totalorder %s18, 1
    %p57 = por %p55, %p56
    %p58 = scmp.ne.s32.totalorder %s49, %s50
    %p59 = scmp.eq.s32.totalorder %s18, 0
    %p60 = por %p58, %p59
    %p61 = scmp.ne.s32.totalorder %s49, %s50
    %p62 = scmp.eq.s32.totalorder %s19, 1
    %p63 = por %p61, %p62
    %p65 = scmp.ne.s32.totalorder %s50, %s64
    %p66 = scmp.eq.s32.totalorder %s19, 0
    %p67 = por %p65, %p66
    %s69 = sadd.s32 %s68, 1
    %p72 = scmp.eq.s32.totalorder %s13, 1
    %p73 = scmp.ne.s32.totalorder %s68, %s70
    %p74 = scmp.eq.s32.totalorder %s13, 0
    %p75 = por %p73, %p74
    %p76 = scmp.ne.s32.totalorder %s68, %s70
    %p77 = scmp.eq.s32.totalorder %s18, 1
    %p78 = por %p76, %p77
    %p79 = scmp.ne.s32.totalorder %s70, %s71
    %p80 = scmp.eq.s32.totalorder %s18, 0
    %p81 = por %p79, %p80
    %p82 = scmp.ne.s32.totalorder %s70, %s71
    %p83 = scmp.eq.s32.totalorder %s19, 1
    %p84 = por %p82, %p83
    %p86 = scmp.ne.s32.totalorder %s71, %s85
    %p87 = scmp.eq.s32.totalorder %s19, 0
    %p88 = por %p86, %p87
    %s90 = sadd.s32 %s89, 1
    %p93 = scmp.eq.s32.totalorder %s13, 1
    %p94 = scmp.ne.s32.totalorder %s89, %s91
    %p95 = scmp.eq.s32.totalorder %s13, 0
    %p96 = por %p94, %p95
    %p97 = scmp.ne.s32.totalorder %s89, %s91
    %p98 = scmp.eq.s32.totalorder %s18, 1
    %p99 = por %p97, %p98
    %p100 = scmp.ne.s32.totalorder %s91, %s92
    %p101 = scmp.eq.s32.totalorder %s18, 0
    %p102 = por %p100, %p101
    %p103 = scmp.ne.s32.totalorder %s91, %s92
    %p104 = scmp.eq.s32.totalorder %s19, 1
    %p105 = por %p103, %p104
    %p107 = scmp.ne.s32.totalorder %s92, %s106
    %p108 = scmp.eq.s32.totalorder %s19, 0
    %p109 = por %p107, %p108
    %s111 = sadd.s32 %s110, 1
    %p114 = scmp.eq.s32.totalorder %s13, 1
    %p115 = scmp.ne.s32.totalorder %s110, %s112
    %p116 = scmp.eq.s32.totalorder %s13, 0
    %p117 = por %p115, %p116
    %p118 = scmp.ne.s32.totalorder %s110, %s112
    %p119 = scmp.eq.s32.totalorder %s18, 1
    %p120 = por %p118, %p119
    %p121 = scmp.ne.s32.totalorder %s112, %s113
    %p122 = scmp.eq.s32.totalorder %s18, 0
    %p123 = por %p121, %p122
    %p124 = scmp.ne.s32.totalorder %s112, %s113
    %p125 = scmp.eq.s32.totalorder %s19, 1
    %p126 = por %p124, %p125
    %p128 = scmp.ne.s32.totalorder %s113, %s127
    %p129 = scmp.eq.s32.totalorder %s19, 0
    %p130 = por %p128, %p129
    %s132 = sadd.s32 %s131, 1
    %p135 = scmp.eq.s32.totalorder %s13, 1
    %p136 = scmp.ne.s32.totalorder %s131, %s133
    %p137 = scmp.eq.s32.totalorder %s13, 0
    %p138 = por %p136, %p137
    %p139 = scmp.ne.s32.totalorder %s131, %s133
    %p140 = scmp.eq.s32.totalorder %s18, 1
    %p141 = por %p139, %p140
    %p142 = scmp.ne.s32.totalorder %s133, %s134
    %p143 = scmp.eq.s32.totalorder %s18, 0
    %p144 = por %p142, %p143
    %p145 = scmp.ne.s32.totalorder %s133, %s134
    %p146 = scmp.eq.s32.totalorder %s19, 1
    %p147 = por %p145, %p146
    %p149 = scmp.ne.s32.totalorder %s134, %s148
    %p150 = scmp.eq.s32.totalorder %s19, 0
    %p151 = por %p149, %p150
    %s153 = sadd.s32 %s152, 1
    %p156 = scmp.eq.s32.totalorder %s13, 1
    %p157 = scmp.ne.s32.totalorder %s152, %s154
    %p158 = scmp.eq.s32.totalorder %s13, 0
    %p159 = por %p157, %p158
    %p160 = scmp.ne.s32.totalorder %s152, %s154
    %p161 = scmp.eq.s32.totalorder %s18, 1
    %p162 = por %p160, %p161
    %p163 = scmp.ne.s32.totalorder %s154, %s155
    %p164 = scmp.eq.s32.totalorder %s18, 0
    %p165 = por %p163, %p164
    %p166 = scmp.ne.s32.totalorder %s154, %s155
    %p167 = scmp.eq.s32.totalorder %s19, 1
    %p168 = por %p166, %p167
    %p170 = scmp.ne.s32.totalorder %s155, %s169
    %p171 = scmp.eq.s32.totalorder %s19, 0
    %p172 = por %p170, %p171
    %s173 = ssub.s32 %s13, %s20
    %p174 = scmp.eq.s32.totalorder %s173, 0
    %s176 = sadd.s32 %s175, 1
    %s177 = scalar_select %p174, %s175, %s176
    %p180 = pneg %p174
    %p181 = scmp.eq.s32.totalorder %s13, 1
    %p182 = por %p180, %p181
    %p183 = scmp.ne.s32.totalorder %s175, %s178
    %p184 = scmp.eq.s32.totalorder %s13, 0
    %p185 = por %p183, %p184
    %p186 = scmp.ne.s32.totalorder %s175, %s178
    %p187 = scmp.eq.s32.totalorder %s18, 1
    %p188 = por %p186, %p187
    %p189 = scmp.ne.s32.totalorder %s178, %s179
    %p190 = scmp.eq.s32.totalorder %s18, 0
    %p191 = por %p189, %p190
    %p192 = scmp.ne.s32.totalorder %s178, %s179
    %p193 = scmp.eq.s32.totalorder %s19, 1
    %p194 = por %p192, %p193
    %p196 = scmp.ne.s32.totalorder %s179, %s195
    %p197 = scmp.eq.s32.totalorder %s19, 0
    %p198 = por %p196, %p197
    %p199 = scmp.le.s32.totalorder 1, %s13
    %p200 = scmp.lt.s32.totalorder %s13, 3
    %p201 = pnand %p199, %p200
    %p202 = pneg %p201
    // Predicated region
    $region9: #{tpu_custom_call.1} parent=5 // pred_check
      _
    $region10: #{tpu_custom_call.1} parent=5 // pred_check_branch
      %204 = sbr.rel (%p201) target = $region12
    $region11: #{tpu_custom_call.1} parent=5 // pred_region
      %s205 = ssub.s32 %s13, 1
      // Predicated region
      $region13: #{tpu_custom_call.1} parent=11 // pred_check
        %p206 = pneg %p60
      $region14: #{tpu_custom_call.1} parent=11 // pred_check_branch
        %208 = sbr.rel (%p206) target = $region16
      $region15: #{tpu_custom_call.1} parent=11 // pred_region
        _
      $region16: #{tpu_custom_call.1} parent=11 // pred_fallthru
        _
      // Predicated region
      $region17: #{tpu_custom_call.1} parent=11 // pred_check
        %p209 = pneg %p81
      $region18: #{tpu_custom_call.1} parent=11 // pred_check_branch
        %211 = sbr.rel (%p209) target = $region20
      $region19: #{tpu_custom_call.1} parent=11 // pred_region
        _
      $region20: #{tpu_custom_call.1} parent=11 // pred_fallthru
        _
      // Predicated region
      $region21: #{tpu_custom_call.1} parent=11 // pred_check
        %p212 = pneg %p102
      $region22: #{tpu_custom_call.1} parent=11 // pred_check_branch
        %214 = sbr.rel (%p212) target = $region24
      $region23: #{tpu_custom_call.1} parent=11 // pred_region
        _
      $region24: #{tpu_custom_call.1} parent=11 // pred_fallthru
        _
      // Predicated region
      $region25: #{tpu_custom_call.1} parent=11 // pred_check
        %p215 = pneg %p123
      $region26: #{tpu_custom_call.1} parent=11 // pred_check_branch
        %217 = sbr.rel (%p215) target = $region28
      $region27: #{tpu_custom_call.1} parent=11 // pred_region
        _
      $region28: #{tpu_custom_call.1} parent=11 // pred_fallthru
        _
      // Predicated region
      $region29: #{tpu_custom_call.1} parent=11 // pred_check
        %p218 = pneg %p144
      $region30: #{tpu_custom_call.1} parent=11 // pred_check_branch
        %220 = sbr.rel (%p218) target = $region32
      $region31: #{tpu_custom_call.1} parent=11 // pred_region
        _
      $region32: #{tpu_custom_call.1} parent=11 // pred_fallthru
        _
      // Predicated region
      $region33: #{tpu_custom_call.1} parent=11 // pred_check
        %p221 = pneg %p165
      $region34: #{tpu_custom_call.1} parent=11 // pred_check_branch
        %223 = sbr.rel (%p221) target = $region36
      $region35: #{tpu_custom_call.1} parent=11 // pred_region
        _
      $region36: #{tpu_custom_call.1} parent=11 // pred_fallthru
        _
    $region12: #{tpu_custom_call.1} parent=5 // pred_fallthru
      _
    %p224 = scmp.lt.s32.totalorder %s13, 2
    // Predicated region
    $region37: #{tpu_custom_call.1} parent=5 // pred_check
      %p225 = pneg %p224
    $region38: #{tpu_custom_call.1} parent=5 // pred_check_branch
      %227 = sbr.rel (%p225) target = $region40
    $region39: #{tpu_custom_call.1} parent=5 // pred_region
      // Predicated region
      $region41: #{tpu_custom_call.1} parent=39 // pred_check
        %p228 = pneg %p33
      $region42: #{tpu_custom_call.1} parent=39 // pred_check_branch
        %230 = sbr.rel (%p228) target = $region44
      $region43: #{tpu_custom_call.1} parent=39 // pred_region
        %p231 = scmp.lt.s32.totalorder %s13, 1
        %s232 = scalar_select %p231, %s13, 1
        %s233 = smul.addr %s232, 16
        %s234 = smul.addr %s233, 8
        %s235 = scalar_lea.vmem %s0, %s234
      $region44: #{tpu_custom_call.1} parent=39 // pred_fallthru
        _
    $region40: #{tpu_custom_call.1} parent=5 // pred_fallthru
      _
    %p236 = scmp.le.s32.totalorder 1, %s13
    %p237 = scmp.lt.s32.totalorder %s13, 3
    %p238 = pnand %p236, %p237
    %p239 = pneg %p238
    // Predicated region
    $region45: #{tpu_custom_call.1} parent=5 // pred_check
      _
    $region46: #{tpu_custom_call.1} parent=5 // pred_check_branch
      %241 = sbr.rel (%p238) target = $region48
    $region47: #{tpu_custom_call.1} parent=5 // pred_region
      %s242 = ssub.s32 %s13, 1
      %p243 = scmp.lt.s32.totalorder %s18, 1
      %s244 = scalar_select %p243, %s18, 1
      %s245 = smul.addr %s244, 16
      %s246 = smul.addr %s245, 8
      %s247 = scalar_lea.vmem %s0, %s246
      %p248 = pneg %p39
      %p249 = pneg %p36
      %p250 = pneg %p60
      %p251 = pneg %p57
      %p252 = pneg %p81
      %p253 = pneg %p78
      %p254 = pneg %p102
      %p255 = pneg %p99
      %p256 = pneg %p123
      %p257 = pneg %p120
      %p258 = pneg %p144
      %p259 = pneg %p141
      %p260 = pneg %p165
      %p261 = pneg %p162
      %p262 = pneg %p191
      %p263 = pneg %p188
      %p264 = scmp.lt.s32.totalorder %s18, 1
      %s265 = scalar_select %p264, %s18, 1
      %s266 = smul.addr %s265, 8
      %s267 = smul.addr %s266, 8
      %s268 = scalar_lea.vmem %s7, %s267
      %p269 = scmp.lt.s32.totalorder %s18, 1
      %s270 = scalar_select %p269, %s18, 1
      %s271 = smul.addr %s270, 16
      %s272 = smul.addr %s271, 8
      %s273 = scalar_lea.vmem %s0, %s272
      %p274 = scmp.lt.s32.totalorder %s18, 1
      %s275 = scalar_select %p274, %s18, 1
      %s276 = smul.addr %s275, 8
      %s277 = smul.addr %s276, 8
      %s278 = scalar_lea.vmem %s7, %s277
      %v280 = vld [vmem:[%s273] sm:$0xff]
      %v281 = vld [vmem:[%s273 + $0x8] sm:$0xff]
      %v282 = vld [vmem:[%s273 + $0x10] sm:$0xff]
      %v283 = vld [vmem:[%s273 + $0x18] sm:$0xff]
      %v284 = vld [vmem:[%s273 + $0x20] sm:$0xff]
      %v285 = vld [vmem:[%s273 + $0x28] sm:$0xff]
      %v286 = vld [vmem:[%s273 + $0x30] sm:$0xff]
      %v287 = vld [vmem:[%s273 + $0x38] sm:$0xff]
      %v288 = vld [vmem:[%s273 + $0x40] sm:$0xff]
      %v289 = vld [vmem:[%s273 + $0x48] sm:$0xff]
      %v290 = vld [vmem:[%s273 + $0x50] sm:$0xff]
      %v291 = vld [vmem:[%s273 + $0x58] sm:$0xff]
      %v292 = vld [vmem:[%s273 + $0x60] sm:$0xff]
      %v293 = vld [vmem:[%s273 + $0x68] sm:$0xff]
      %v294 = vld [vmem:[%s273 + $0x70] sm:$0xff]
      %v295 = vld [vmem:[%s273 + $0x78] sm:$0xff]
      %312 = vrot.lane.b32.xlu0 %v280, 124
      %v313 = vpop.permute.xlu0 %312
      %314 = vrot.lane.b32.xlu0 %v281, 124
      %v315 = vpop.permute.xlu0 %314
      %316 = vrot.lane.b32.xlu0 %v282, 124
      %v317 = vpop.permute.xlu0 %316
      %318 = vrot.lane.b32.xlu0 %v283, 124
      %v319 = vpop.permute.xlu0 %318
      %320 = vrot.lane.b32.xlu0 %v284, 124
      %v321 = vpop.permute.xlu0 %320
      %322 = vrot.lane.b32.xlu0 %v285, 124
      %v323 = vpop.permute.xlu0 %322
      %324 = vrot.lane.b32.xlu0 %v286, 124
      %v325 = vpop.permute.xlu0 %324
      %326 = vrot.lane.b32.xlu0 %v287, 124
      %v327 = vpop.permute.xlu0 %326
      %328 = vrot.lane.b32.xlu0 %v288, 124
      %v329 = vpop.permute.xlu0 %328
      %330 = vrot.lane.b32.xlu0 %v289, 124
      %v331 = vpop.permute.xlu0 %330
      %332 = vrot.lane.b32.xlu0 %v290, 124
      %v333 = vpop.permute.xlu0 %332
      %334 = vrot.lane.b32.xlu0 %v291, 124
      %v335 = vpop.permute.xlu0 %334
      %336 = vrot.lane.b32.xlu0 %v292, 124
      %v337 = vpop.permute.xlu0 %336
      %338 = vrot.lane.b32.xlu0 %v293, 124
      %v339 = vpop.permute.xlu0 %338
      %340 = vrot.lane.b32.xlu0 %v294, 124
      %v341 = vpop.permute.xlu0 %340
      %342 = vrot.lane.b32.xlu0 %v295, 124
      %v343 = vpop.permute.xlu0 %342
      %v360 = vmax.f32 %v280, %v313
      %v361 = vmax.f32 %v281, %v315
      %v362 = vmax.f32 %v282, %v317
      %v363 = vmax.f32 %v283, %v319
      %v364 = vmax.f32 %v284, %v321
      %v365 = vmax.f32 %v285, %v323
      %v366 = vmax.f32 %v286, %v325
      %v367 = vmax.f32 %v287, %v327
      %v368 = vmax.f32 %v288, %v329
      %v369 = vmax.f32 %v289, %v331
      %v370 = vmax.f32 %v290, %v333
      %v371 = vmax.f32 %v291, %v335
      %v372 = vmax.f32 %v292, %v337
      %v373 = vmax.f32 %v293, %v339
      %v374 = vmax.f32 %v294, %v341
      %v375 = vmax.f32 %v295, %v343
      %v376 = vmax.f32 %v360, %v361
      %v377 = vmax.f32 %v362, %v363
      %v378 = vmax.f32 %v364, %v365
      %v379 = vmax.f32 %v366, %v367
      %v380 = vmax.f32 %v368, %v369
      %v381 = vmax.f32 %v370, %v371
      %v382 = vmax.f32 %v372, %v373
      %v383 = vmax.f32 %v374, %v375
      %s384 = scalar_lea.vmem [#allocation2], 16
      %vm385 = vcmask 31744
      %386 = vst.msk [vmem:[%s384 + $0x1] sm:$0xff] %vm385, %v376
      %387 = vst.msk [vmem:[%s384 + $0x11] sm:$0xff] %vm385, %v377
      %388 = vst.msk [vmem:[%s384 + $0x21] sm:$0xff] %vm385, %v378
      %389 = vst.msk [vmem:[%s384 + $0x31] sm:$0xff] %vm385, %v379
      %390 = vst.msk [vmem:[%s384 + $0x41] sm:$0xff] %vm385, %v380
      %391 = vst.msk [vmem:[%s384 + $0x51] sm:$0xff] %vm385, %v381
      %392 = vst.msk [vmem:[%s384 + $0x61] sm:$0xff] %vm385, %v382
      %393 = vst.msk [vmem:[%s384 + $0x71] sm:$0xff] %vm385, %v383
      %394 = vst.msk [vmem:[#allocation2 + $0x1] sm:$0xff] %vm385, %v376
      %s395 = scalar_lea.vmem [#allocation2], 144
      %396 = vst.msk [vmem:[%s395 + $0x1] sm:$0xff] %vm385, %v383
      %v397 = vld [vmem:[#allocation2 + $0x1] sm:$0x1]
      %v398 = vld [vmem:[#allocation2 + $0x11] sm:$0x1]
      %v399 = vld [vmem:[#allocation2 + $0x21] sm:$0x1]
      %v400 = vld [vmem:[#allocation2 + $0x31] sm:$0x1]
      %v401 = vld [vmem:[#allocation2 + $0x41] sm:$0x1]
      %v402 = vld [vmem:[#allocation2 + $0x51] sm:$0x1]
      %v403 = vld [vmem:[#allocation2 + $0x61] sm:$0x1]
      %v404 = vld [vmem:[#allocation2 + $0x71] sm:$0x1]
      %v405 = vld [vmem:[#allocation2 + $0x81] sm:$0x1]
      %v406 = vld [vmem:[#allocation2 + $0x91] sm:$0x1]
      %vm407 = vcmask 24576
      %408 = vst.msk [vmem:[#allocation2] sm:$0x1] %vm407, %v397
      %409 = vst.msk [vmem:[#allocation2 + $0x10] sm:$0x1] %vm407, %v398
      %410 = vst.msk [vmem:[#allocation2 + $0x20] sm:$0x1] %vm407, %v399
      %411 = vst.msk [vmem:[#allocation2 + $0x30] sm:$0x1] %vm407, %v400
      %412 = vst.msk [vmem:[#allocation2 + $0x40] sm:$0x1] %vm407, %v401
      %413 = vst.msk [vmem:[#allocation2 + $0x50] sm:$0x1] %vm407, %v402
      %414 = vst.msk [vmem:[#allocation2 + $0x60] sm:$0x1] %vm407, %v403
      %415 = vst.msk [vmem:[#allocation2 + $0x70] sm:$0x1] %vm407, %v404
      %416 = vst.msk [vmem:[#allocation2 + $0x80] sm:$0x1] %vm407, %v405
      %417 = vst.msk [vmem:[#allocation2 + $0x90] sm:$0x1] %vm407, %v406
      %v418 = vld [vmem:[#allocation2 + $0x8] sm:$0x1]
      %v419 = vld [vmem:[#allocation2 + $0x18] sm:$0x1]
      %v420 = vld [vmem:[#allocation2 + $0x28] sm:$0x1]
      %v421 = vld [vmem:[#allocation2 + $0x38] sm:$0x1]
      %v422 = vld [vmem:[#allocation2 + $0x48] sm:$0x1]
      %v423 = vld [vmem:[#allocation2 + $0x58] sm:$0x1]
      %v424 = vld [vmem:[#allocation2 + $0x68] sm:$0x1]
      %v425 = vld [vmem:[#allocation2 + $0x78] sm:$0x1]
      %v426 = vld [vmem:[#allocation2 + $0x88] sm:$0x1]
      %v427 = vld [vmem:[#allocation2 + $0x98] sm:$0x1]
      %428 = vst.msk [vmem:[#allocation2 + $0x9] sm:$0x1] %vm407, %v418
      %429 = vst.msk [vmem:[#allocation2 + $0x19] sm:$0x1] %vm407, %v419
      %430 = vst.msk [vmem:[#allocation2 + $0x29] sm:$0x1] %vm407, %v420
      %431 = vst.msk [vmem:[#allocation2 + $0x39] sm:$0x1] %vm407, %v421
      %432 = vst.msk [vmem:[#allocation2 + $0x49] sm:$0x1] %vm407, %v422
      %433 = vst.msk [vmem:[#allocation2 + $0x59] sm:$0x1] %vm407, %v423
      %434 = vst.msk [vmem:[#allocation2 + $0x69] sm:$0x1] %vm407, %v424
      %435 = vst.msk [vmem:[#allocation2 + $0x79] sm:$0x1] %vm407, %v425
      %436 = vst.msk [vmem:[#allocation2 + $0x89] sm:$0x1] %vm407, %v426
      %437 = vst.msk [vmem:[#allocation2 + $0x99] sm:$0x1] %vm407, %v427
      %v438 = vld [vmem:[#allocation2] sm:$0xff]
      %v439 = vld [vmem:[#allocation2 + $0x10] sm:$0xff]
      %v440 = vld [vmem:[#allocation2 + $0x20] sm:$0xff]
      %v441 = vld [vmem:[#allocation2 + $0x30] sm:$0xff]
      %v442 = vld [vmem:[#allocation2 + $0x40] sm:$0xff]
      %v443 = vld [vmem:[#allocation2 + $0x50] sm:$0xff]
      %v444 = vld [vmem:[#allocation2 + $0x60] sm:$0xff]
      %v445 = vld [vmem:[#allocation2 + $0x70] sm:$0xff]
      %v446 = vld [vmem:[#allocation2 + $0x1] sm:$0xff]
      %v447 = vld [vmem:[#allocation2 + $0x11] sm:$0xff]
      %v448 = vld [vmem:[#allocation2 + $0x21] sm:$0xff]
      %v449 = vld [vmem:[#allocation2 + $0x31] sm:$0xff]
      %v450 = vld [vmem:[#allocation2 + $0x41] sm:$0xff]
      %v451 = vld [vmem:[#allocation2 + $0x51] sm:$0xff]
      %v452 = vld [vmem:[#allocation2 + $0x61] sm:$0xff]
      %v453 = vld [vmem:[#allocation2 + $0x71] sm:$0xff]
      %v454 = vld [vmem:[#allocation2 + $0x2] sm:$0xff]
      %v455 = vld [vmem:[#allocation2 + $0x12] sm:$0xff]
      %v456 = vld [vmem:[#allocation2 + $0x22] sm:$0xff]
      %v457 = vld [vmem:[#allocation2 + $0x32] sm:$0xff]
      %v458 = vld [vmem:[#allocation2 + $0x42] sm:$0xff]
      %v459 = vld [vmem:[#allocation2 + $0x52] sm:$0xff]
      %v460 = vld [vmem:[#allocation2 + $0x62] sm:$0xff]
      %v461 = vld [vmem:[#allocation2 + $0x72] sm:$0xff]
      %v462 = vld [vmem:[%s384] sm:$0xff]
      %v463 = vld [vmem:[%s384 + $0x10] sm:$0xff]
      %v464 = vld [vmem:[%s384 + $0x20] sm:$0xff]
      %v465 = vld [vmem:[%s384 + $0x30] sm:$0xff]
      %v466 = vld [vmem:[%s384 + $0x40] sm:$0xff]
      %v467 = vld [vmem:[%s384 + $0x50] sm:$0xff]
      %v468 = vld [vmem:[%s384 + $0x60] sm:$0xff]
      %v469 = vld [vmem:[%s384 + $0x70] sm:$0xff]
      %v470 = vld [vmem:[%s384 + $0x1] sm:$0xff]
      %v471 = vld [vmem:[%s384 + $0x11] sm:$0xff]
      %v472 = vld [vmem:[%s384 + $0x21] sm:$0xff]
      %v473 = vld [vmem:[%s384 + $0x31] sm:$0xff]
      %v474 = vld [vmem:[%s384 + $0x41] sm:$0xff]
      %v475 = vld [vmem:[%s384 + $0x51] sm:$0xff]
      %v476 = vld [vmem:[%s384 + $0x61] sm:$0xff]
      %v477 = vld [vmem:[%s384 + $0x71] sm:$0xff]
      %v478 = vld [vmem:[%s384 + $0x2] sm:$0xff]
      %v479 = vld [vmem:[%s384 + $0x12] sm:$0xff]
      %v480 = vld [vmem:[%s384 + $0x22] sm:$0xff]
      %v481 = vld [vmem:[%s384 + $0x32] sm:$0xff]
      %v482 = vld [vmem:[%s384 + $0x42] sm:$0xff]
      %v483 = vld [vmem:[%s384 + $0x52] sm:$0xff]
      %v484 = vld [vmem:[%s384 + $0x62] sm:$0xff]
      %v485 = vld [vmem:[%s384 + $0x72] sm:$0xff]
      %s486 = scalar_lea.vmem [#allocation2], 32
      %v487 = vld [vmem:[%s486] sm:$0xff]
      %v488 = vld [vmem:[%s486 + $0x10] sm:$0xff]
      %v489 = vld [vmem:[%s486 + $0x20] sm:$0xff]
      %v490 = vld [vmem:[%s486 + $0x30] sm:$0xff]
      %v491 = vld [vmem:[%s486 + $0x40] sm:$0xff]
      %v492 = vld [vmem:[%s486 + $0x50] sm:$0xff]
      %v493 = vld [vmem:[%s486 + $0x60] sm:$0xff]
      %v494 = vld [vmem:[%s486 + $0x70] sm:$0xff]
      %v495 = vld [vmem:[%s486 + $0x1] sm:$0xff]
      %v496 = vld [vmem:[%s486 + $0x11] sm:$0xff]
      %v497 = vld [vmem:[%s486 + $0x21] sm:$0xff]
      %v498 = vld [vmem:[%s486 + $0x31] sm:$0xff]
      %v499 = vld [vmem:[%s486 + $0x41] sm:$0xff]
      %v500 = vld [vmem:[%s486 + $0x51] sm:$0xff]
      %v501 = vld [vmem:[%s486 + $0x61] sm:$0xff]
      %v502 = vld [vmem:[%s486 + $0x71] sm:$0xff]
      %v503 = vld [vmem:[%s486 + $0x2] sm:$0xff]
      %v504 = vld [vmem:[%s486 + $0x12] sm:$0xff]
      %v505 = vld [vmem:[%s486 + $0x22] sm:$0xff]
      %v506 = vld [vmem:[%s486 + $0x32] sm:$0xff]
      %v507 = vld [vmem:[%s486 + $0x42] sm:$0xff]
      %v508 = vld [vmem:[%s486 + $0x52] sm:$0xff]
      %v509 = vld [vmem:[%s486 + $0x62] sm:$0xff]
      %v510 = vld [vmem:[%s486 + $0x72] sm:$0xff]
      %519 = vrot.lane.b32.xlu0 %v446, 4
      %v520 = vpop.permute.xlu0 %519
      %521 = vrot.lane.b32.xlu0 %v447, 4
      %v522 = vpop.permute.xlu0 %521
      %523 = vrot.lane.b32.xlu0 %v448, 4
      %v524 = vpop.permute.xlu0 %523
      %525 = vrot.lane.b32.xlu0 %v449, 4
      %v526 = vpop.permute.xlu0 %525
      %527 = vrot.lane.b32.xlu0 %v450, 4
      %v528 = vpop.permute.xlu0 %527
      %529 = vrot.lane.b32.xlu0 %v451, 4
      %v530 = vpop.permute.xlu0 %529
      %531 = vrot.lane.b32.xlu0 %v452, 4
      %v532 = vpop.permute.xlu0 %531
      %533 = vrot.lane.b32.xlu0 %v453, 4
      %v534 = vpop.permute.xlu0 %533
      %551 = vrot.lane.b32.xlu0 %v454, 8
      %v552 = vpop.permute.xlu0 %551
      %553 = vrot.lane.b32.xlu0 %v455, 8
      %v554 = vpop.permute.xlu0 %553
      %555 = vrot.lane.b32.xlu0 %v456, 8
      %v556 = vpop.permute.xlu0 %555
      %557 = vrot.lane.b32.xlu0 %v457, 8
      %v558 = vpop.permute.xlu0 %557
      %559 = vrot.lane.b32.xlu0 %v458, 8
      %v560 = vpop.permute.xlu0 %559
      %561 = vrot.lane.b32.xlu0 %v459, 8
      %v562 = vpop.permute.xlu0 %561
      %563 = vrot.lane.b32.xlu0 %v460, 8
      %v564 = vpop.permute.xlu0 %563
      %565 = vrot.lane.b32.xlu0 %v461, 8
      %v566 = vpop.permute.xlu0 %565
      %583 = vrot.lane.b32.xlu0 %v462, 12
      %v584 = vpop.permute.xlu0 %583
      %585 = vrot.lane.b32.xlu0 %v463, 12
      %v586 = vpop.permute.xlu0 %585
      %587 = vrot.lane.b32.xlu0 %v464, 12
      %v588 = vpop.permute.xlu0 %587
      %589 = vrot.lane.b32.xlu0 %v465, 12
      %v590 = vpop.permute.xlu0 %589
      %591 = vrot.lane.b32.xlu0 %v466, 12
      %v592 = vpop.permute.xlu0 %591
      %593 = vrot.lane.b32.xlu0 %v467, 12
      %v594 = vpop.permute.xlu0 %593
      %595 = vrot.lane.b32.xlu0 %v468, 12
      %v596 = vpop.permute.xlu0 %595
      %597 = vrot.lane.b32.xlu0 %v469, 12
      %v598 = vpop.permute.xlu0 %597
      %615 = vrot.lane.b32.xlu0 %v470, 16
      %v616 = vpop.permute.xlu0 %615
      %617 = vrot.lane.b32.xlu0 %v471, 16
      %v618 = vpop.permute.xlu0 %617
      %619 = vrot.lane.b32.xlu0 %v472, 16
      %v620 = vpop.permute.xlu0 %619
      %621 = vrot.lane.b32.xlu0 %v473, 16
      %v622 = vpop.permute.xlu0 %621
      %623 = vrot.lane.b32.xlu0 %v474, 16
      %v624 = vpop.permute.xlu0 %623
      %625 = vrot.lane.b32.xlu0 %v475, 16
      %v626 = vpop.permute.xlu0 %625
      %627 = vrot.lane.b32.xlu0 %v476, 16
      %v628 = vpop.permute.xlu0 %627
      %629 = vrot.lane.b32.xlu0 %v477, 16
      %v630 = vpop.permute.xlu0 %629
      %647 = vrot.lane.b32.xlu0 %v478, 20
      %v648 = vpop.permute.xlu0 %647
      %649 = vrot.lane.b32.xlu0 %v479, 20
      %v650 = vpop.permute.xlu0 %649
      %651 = vrot.lane.b32.xlu0 %v480, 20
      %v652 = vpop.permute.xlu0 %651
      %653 = vrot.lane.b32.xlu0 %v481, 20
      %v654 = vpop.permute.xlu0 %653
      %655 = vrot.lane.b32.xlu0 %v482, 20
      %v656 = vpop.permute.xlu0 %655
      %657 = vrot.lane.b32.xlu0 %v483, 20
      %v658 = vpop.permute.xlu0 %657
      %659 = vrot.lane.b32.xlu0 %v484, 20
      %v660 = vpop.permute.xlu0 %659
      %661 = vrot.lane.b32.xlu0 %v485, 20
      %v662 = vpop.permute.xlu0 %661
      %679 = vrot.lane.b32.xlu0 %v487, 24
      %v680 = vpop.permute.xlu0 %679
      %681 = vrot.lane.b32.xlu0 %v488, 24
      %v682 = vpop.permute.xlu0 %681
      %683 = vrot.lane.b32.xlu0 %v489, 24
      %v684 = vpop.permute.xlu0 %683
      %685 = vrot.lane.b32.xlu0 %v490, 24
      %v686 = vpop.permute.xlu0 %685
      %687 = vrot.lane.b32.xlu0 %v491, 24
      %v688 = vpop.permute.xlu0 %687
      %689 = vrot.lane.b32.xlu0 %v492, 24
      %v690 = vpop.permute.xlu0 %689
      %691 = vrot.lane.b32.xlu0 %v493, 24
      %v692 = vpop.permute.xlu0 %691
      %693 = vrot.lane.b32.xlu0 %v494, 24
      %v694 = vpop.permute.xlu0 %693
      %711 = vrot.lane.b32.xlu0 %v495, 28
      %v712 = vpop.permute.xlu0 %711
      %713 = vrot.lane.b32.xlu0 %v496, 28
      %v714 = vpop.permute.xlu0 %713
      %715 = vrot.lane.b32.xlu0 %v497, 28
      %v716 = vpop.permute.xlu0 %715
      %717 = vrot.lane.b32.xlu0 %v498, 28
      %v718 = vpop.permute.xlu0 %717
      %719 = vrot.lane.b32.xlu0 %v499, 28
      %v720 = vpop.permute.xlu0 %719
      %721 = vrot.lane.b32.xlu0 %v500, 28
      %v722 = vpop.permute.xlu0 %721
      %723 = vrot.lane.b32.xlu0 %v501, 28
      %v724 = vpop.permute.xlu0 %723
      %725 = vrot.lane.b32.xlu0 %v502, 28
      %v726 = vpop.permute.xlu0 %725
      %743 = vrot.lane.b32.xlu0 %v503, 32
      %v744 = vpop.permute.xlu0 %743
      %745 = vrot.lane.b32.xlu0 %v504, 32
      %v746 = vpop.permute.xlu0 %745
      %747 = vrot.lane.b32.xlu0 %v505, 32
      %v748 = vpop.permute.xlu0 %747
      %749 = vrot.lane.b32.xlu0 %v506, 32
      %v750 = vpop.permute.xlu0 %749
      %751 = vrot.lane.b32.xlu0 %v507, 32
      %v752 = vpop.permute.xlu0 %751
      %753 = vrot.lane.b32.xlu0 %v508, 32
      %v754 = vpop.permute.xlu0 %753
      %755 = vrot.lane.b32.xlu0 %v509, 32
      %v756 = vpop.permute.xlu0 %755
      %757 = vrot.lane.b32.xlu0 %v510, 32
      %v758 = vpop.permute.xlu0 %757
      %v767 = vsel %vm385, %v438, %v520
      %v768 = vsel %vm385, %v439, %v522
      %v769 = vsel %vm385, %v440, %v524
      %v770 = vsel %vm385, %v441, %v526
      %v771 = vsel %vm385, %v442, %v528
      %v772 = vsel %vm385, %v443, %v530
      %v773 = vsel %vm385, %v444, %v532
      %v774 = vsel %vm385, %v445, %v534
      %vm775 = vcmask 64512
      %v776 = vsel %vm775, %v767, %v552
      %v777 = vsel %vm775, %v768, %v554
      %v778 = vsel %vm775, %v769, %v556
      %v779 = vsel %vm775, %v770, %v558
      %v780 = vsel %vm775, %v771, %v560
      %v781 = vsel %vm775, %v772, %v562
      %v782 = vsel %vm775, %v773, %v564
      %v783 = vsel %vm775, %v774, %v566
      %vm784 = vcmask 97280
      %v785 = vsel %vm784, %v776, %v584
      %v786 = vsel %vm784, %v777, %v586
      %v787 = vsel %vm784, %v778, %v588
      %v788 = vsel %vm784, %v779, %v590
      %v789 = vsel %vm784, %v780, %v592
      %v790 = vsel %vm784, %v781, %v594
      %v791 = vsel %vm784, %v782, %v596
      %v792 = vsel %vm784, %v783, %v598
      %vm793 = vcmask 130048
      %v794 = vsel %vm793, %v785, %v616
      %v795 = vsel %vm793, %v786, %v618
      %v796 = vsel %vm793, %v787, %v620
      %v797 = vsel %vm793, %v788, %v622
      %v798 = vsel %vm793, %v789, %v624
      %v799 = vsel %vm793, %v790, %v626
      %v800 = vsel %vm793, %v791, %v628
      %v801 = vsel %vm793, %v792, %v630
      %vm802 = vcmask 162816
      %v803 = vsel %vm802, %v794, %v648
      %v804 = vsel %vm802, %v795, %v650
      %v805 = vsel %vm802, %v796, %v652
      %v806 = vsel %vm802, %v797, %v654
      %v807 = vsel %vm802, %v798, %v656
      %v808 = vsel %vm802, %v799, %v658
      %v809 = vsel %vm802, %v800, %v660
      %v810 = vsel %vm802, %v801, %v662
      %vm811 = vcmask 195584
      %v812 = vsel %vm811, %v803, %v680
      %v813 = vsel %vm811, %v804, %v682
      %v814 = vsel %vm811, %v805, %v684
      %v815 = vsel %vm811, %v806, %v686
      %v816 = vsel %vm811, %v807, %v688
      %v817 = vsel %vm811, %v808, %v690
      %v818 = vsel %vm811, %v809, %v692
      %v819 = vsel %vm811, %v810, %v694
      %vm820 = vcmask 228352
      %v821 = vsel %vm820, %v812, %v712
      %v822 = vsel %vm820, %v813, %v714
      %v823 = vsel %vm820, %v814, %v716
      %v824 = vsel %vm820, %v815, %v718
      %v825 = vsel %vm820, %v816, %v720
      %v826 = vsel %vm820, %v817, %v722
      %v827 = vsel %vm820, %v818, %v724
      %v828 = vsel %vm820, %v819, %v726
      %vm829 = vcmask 261120
      %v830 = vsel %vm829, %v821, %v744
      %v831 = vsel %vm829, %v822, %v746
      %v832 = vsel %vm829, %v823, %v748
      %v833 = vsel %vm829, %v824, %v750
      %v834 = vsel %vm829, %v825, %v752
      %v835 = vsel %vm829, %v826, %v754
      %v836 = vsel %vm829, %v827, %v756
      %v837 = vsel %vm829, %v828, %v758
      %v838 = vpack.c.bf16 %v831, %v830
      %v839 = vpack.c.bf16 %v833, %v832
      %v840 = vpack.c.bf16 %v835, %v834
      %v841 = vpack.c.bf16 %v837, %v836
      %v842 = vld [vmem:[%s1] sm:$0xf]
      %v843 = vld [vmem:[%s1 + $0x4] sm:$0xf]
      %v844 = vld [vmem:[%s1 + $0x8] sm:$0xf]
      %v845 = vld [vmem:[%s1 + $0xc] sm:$0xf]
      %v846 = vld [vmem:[%s1 + $0x10] sm:$0x3]
      %v852 = vunpack.c.l.b16 %v842
      %v853 = vunpack.c.l.b16 %v843
      %v854 = vunpack.c.l.b16 %v844
      %v855 = vunpack.c.l.b16 %v845
      %v856 = vunpack.c.l.b16 %v846
      %v857 = vpack.c.b16 %v853, %v852
      %v858 = vpack.c.b16 %v855, %v854
      %v859 = vpack.c.b16 %v856, %v856
      %vm862 = vcmask 293888
      %v864 = vsel %vm862, %v838, 0
      %v867 = vsel %vm862, %v839, 0
      %v870 = vsel %vm862, %v840, 0
      %v873 = vsel %vm862, %v841, 0
      %vm875 = vcmask 1041408
      %v877 = vsel %vm875, %v859, 0
      %879 = vmatprep.subr.bf16.mxu0 0
      %880 = vmatpush1.bf16.msra.mxu0 0
      %881 = vmatprep.subr.bf16.mxu0 0
      %882 = vmatpush1.bf16.msra.mxu0 0
      %883 = vmatprep.subr.bf16.mxu0 0
      %884 = vmatpush1.bf16.msra.mxu0 0
      %885 = vmatprep.subr.bf16.mxu0 0
      %886 = vmatpush1.bf16.msra.mxu0 0
      %887 = vmatprep.subr.bf16.mxu0 0
      %888 = vmatpush1.bf16.msra.mxu0 0
      %889 = vmatprep.subr.bf16.mxu0 0
      %890 = vmatpush1.bf16.msra.mxu0 %v877
      %891 = vmatprep.subr.bf16.mxu0 0
      %892 = vmatpush1.bf16.msra.mxu0 %v858
      %893 = vmatprep.subr.bf16.mxu0 0
      %894 = vmatpush1.bf16.msra.mxu0 %v857
      %895 = vmatprep.subr.bf16.mxu0 0
      %896 = vmatpush2.bf16.msra.mxu0 0
      %897 = vmatprep.subr.bf16.mxu0 0
      %898 = vmatpush2.bf16.msra.mxu0 0
      %899 = vmatprep.subr.bf16.mxu0 0
      %900 = vmatpush2.bf16.msra.mxu0 0
      %901 = vmatprep.subr.bf16.mxu0 0
      %902 = vmatpush2.bf16.msra.mxu0 0
      %903 = vmatprep.subr.bf16.mxu0 0
      %904 = vmatpush2.bf16.msra.mxu0 0
      %905 = vmatprep.subr.bf16.mxu0 0
      %906 = vmatpush2.bf16.msra.mxu0 0
      %907 = vmatprep.subr.bf16.mxu0 0
      %908 = vmatpush2.bf16.msra.mxu0 0
      %909 = vmatprep.subr.bf16.mxu0 0
      %910 = vmatpush2.bf16.msra.mxu0 0
      %911 = vmatprep.mubr.bf16.mxu0 0
      %912 = vmatmul.mubr.bf16.gmra.mxu0 %v864
      %v913 = vpop.f32.mrf.mxu0
      %v914 = vadd.f32 0.0, %v913
      %v915 = vpop.f32.mrf.mxu0
      %v916 = vpop.f32.mrf.mxu0
      %v917 = vadd.f32 0.0, %v916
      %v918 = vpop.f32.mrf.mxu0
      %919 = vmatprep.mubr.bf16.mxu0 0
      %920 = vmatmul.mubr.bf16.gmra.mxu0 %v867
      %v921 = vpop.f32.mrf.mxu0
      %v922 = vadd.f32 0.0, %v921
      %v923 = vpop.f32.mrf.mxu0
      %v924 = vpop.f32.mrf.mxu0
      %v925 = vadd.f32 0.0, %v924
      %v926 = vpop.f32.mrf.mxu0
      %927 = vmatprep.mubr.bf16.mxu0 0
      %928 = vmatmul.mubr.bf16.gmra.mxu0 %v870
      %v929 = vpop.f32.mrf.mxu0
      %v930 = vadd.f32 0.0, %v929
      %v931 = vpop.f32.mrf.mxu0
      %v932 = vpop.f32.mrf.mxu0
      %v933 = vadd.f32 0.0, %v932
      %v934 = vpop.f32.mrf.mxu0
      %935 = vmatprep.mubr.bf16.mxu0 0
      %936 = vmatmul.mubr.bf16.gmra.mxu0 %v873
      %v937 = vpop.f32.mrf.mxu0
      %v938 = vadd.f32 0.0, %v937
      %v939 = vpop.f32.mrf.mxu0
      %v940 = vpop.f32.mrf.mxu0
      %v941 = vadd.f32 0.0, %v940
      %v942 = vpop.f32.mrf.mxu0
      %943 = vdwg.mxu0
      %v944 = vld [vmem:[%s2] sm:$0x1]
      %v946 = vlaneseq
      %v947 = vshrl.u32 %v946, 7
      %v948 = vsub.s32 0, %v947
      %v949 = vrot.slane %v944, %v948
      %v951 = vmul.f32 %v914, %v949
      %v952 = vmul.f32 %v917, %v949
      %v953 = vmul.f32 %v922, %v949
      %v954 = vmul.f32 %v925, %v949
      %v955 = vmul.f32 %v930, %v949
      %v956 = vmul.f32 %v933, %v949
      %v957 = vmul.f32 %v938, %v949
      %v958 = vmul.f32 %v941, %v949
      %v959 = vld [vmem:[%s3] sm:$0x1]
      %v961 = vlaneseq
      %v962 = vshrl.u32 %v961, 7
      %v963 = vsub.s32 0, %v962
      %v964 = vrot.slane %v959, %v963
      %v966 = vadd.f32 %v951, %v964
      %v967 = vadd.f32 %v952, %v964
      %v968 = vadd.f32 %v953, %v964
      %v969 = vadd.f32 %v954, %v964
      %v970 = vadd.f32 %v955, %v964
      %v971 = vadd.f32 %v956, %v964
      %v972 = vadd.f32 %v957, %v964
      %v973 = vadd.f32 %v958, %v964
      %v974 = vmax.f32 %v966, 0.0
      %v975 = vmax.f32 %v967, 0.0
      %v976 = vmax.f32 %v968, 0.0
      %v977 = vmax.f32 %v969, 0.0
      %v978 = vmax.f32 %v970, 0.0
      %v979 = vmax.f32 %v971, 0.0
      %v980 = vmax.f32 %v972, 0.0
      %v981 = vmax.f32 %v973, 0.0
      %s982 = scalar_lea.vmem [#allocation3], 16
      %983 = vst.msk [vmem:[%s982 + $0x1] sm:$0xff] %vm775, %v974
      %984 = vst.msk [vmem:[%s982 + $0x11] sm:$0xff] %vm775, %v975
      %985 = vst.msk [vmem:[%s982 + $0x21] sm:$0xff] %vm775, %v976
      %986 = vst.msk [vmem:[%s982 + $0x31] sm:$0xff] %vm775, %v977
      %987 = vst.msk [vmem:[%s982 + $0x41] sm:$0xff] %vm775, %v978
      %988 = vst.msk [vmem:[%s982 + $0x51] sm:$0xff] %vm775, %v979
      %989 = vst.msk [vmem:[%s982 + $0x61] sm:$0xff] %vm775, %v980
      %990 = vst.msk [vmem:[%s982 + $0x71] sm:$0xff] %vm775, %v981
      %991 = vst.msk [vmem:[#allocation3 + $0x1] sm:$0xff] %vm775, %v974
      %s992 = scalar_lea.vmem [#allocation3], 144
      %993 = vst.msk [vmem:[%s992 + $0x1] sm:$0xff] %vm775, %v981
      %v994 = vld [vmem:[#allocation3 + $0x1] sm:$0x1]
      %v995 = vld [vmem:[#allocation3 + $0x11] sm:$0x1]
      %v996 = vld [vmem:[#allocation3 + $0x21] sm:$0x1]
      %v997 = vld [vmem:[#allocation3 + $0x31] sm:$0x1]
      %v998 = vld [vmem:[#allocation3 + $0x41] sm:$0x1]
      %v999 = vld [vmem:[#allocation3 + $0x51] sm:$0x1]
      %v1000 = vld [vmem:[#allocation3 + $0x61] sm:$0x1]
      %v1001 = vld [vmem:[#allocation3 + $0x71] sm:$0x1]
      %v1002 = vld [vmem:[#allocation3 + $0x81] sm:$0x1]
      %v1003 = vld [vmem:[#allocation3 + $0x91] sm:$0x1]
      %vm1004 = vcmask 57344
      %1005 = vst.msk [vmem:[#allocation3] sm:$0x1] %vm1004, %v994
      %1006 = vst.msk [vmem:[#allocation3 + $0x10] sm:$0x1] %vm1004, %v995
      %1007 = vst.msk [vmem:[#allocation3 + $0x20] sm:$0x1] %vm1004, %v996
      %1008 = vst.msk [vmem:[#allocation3 + $0x30] sm:$0x1] %vm1004, %v997
      %1009 = vst.msk [vmem:[#allocation3 + $0x40] sm:$0x1] %vm1004, %v998
      %1010 = vst.msk [vmem:[#allocation3 + $0x50] sm:$0x1] %vm1004, %v999
      %1011 = vst.msk [vmem:[#allocation3 + $0x60] sm:$0x1] %vm1004, %v1000
      %1012 = vst.msk [vmem:[#allocation3 + $0x70] sm:$0x1] %vm1004, %v1001
      %1013 = vst.msk [vmem:[#allocation3 + $0x80] sm:$0x1] %vm1004, %v1002
      %1014 = vst.msk [vmem:[#allocation3 + $0x90] sm:$0x1] %vm1004, %v1003
      %v1015 = vld [vmem:[#allocation3 + $0x8] sm:$0x1]
      %v1016 = vld [vmem:[#allocation3 + $0x18] sm:$0x1]
      %v1017 = vld [vmem:[#allocation3 + $0x28] sm:$0x1]
      %v1018 = vld [vmem:[#allocation3 + $0x38] sm:$0x1]
      %v1019 = vld [vmem:[#allocation3 + $0x48] sm:$0x1]
      %v1020 = vld [vmem:[#allocation3 + $0x58] sm:$0x1]
      %v1021 = vld [vmem:[#allocation3 + $0x68] sm:$0x1]
      %v1022 = vld [vmem:[#allocation3 + $0x78] sm:$0x1]
      %v1023 = vld [vmem:[#allocation3 + $0x88] sm:$0x1]
      %v1024 = vld [vmem:[#allocation3 + $0x98] sm:$0x1]
      %1025 = vst.msk [vmem:[#allocation3 + $0x9] sm:$0x1] %vm1004, %v1015
      %1026 = vst.msk [vmem:[#allocation3 + $0x19] sm:$0x1] %vm1004, %v1016
      %1027 = vst.msk [vmem:[#allocation3 + $0x29] sm:$0x1] %vm1004, %v1017
      %1028 = vst.msk [vmem:[#allocation3 + $0x39] sm:$0x1] %vm1004, %v1018
      %1029 = vst.msk [vmem:[#allocation3 + $0x49] sm:$0x1] %vm1004, %v1019
      %1030 = vst.msk [vmem:[#allocation3 + $0x59] sm:$0x1] %vm1004, %v1020
      %1031 = vst.msk [vmem:[#allocation3 + $0x69] sm:$0x1] %vm1004, %v1021
      %1032 = vst.msk [vmem:[#allocation3 + $0x79] sm:$0x1] %vm1004, %v1022
      %1033 = vst.msk [vmem:[#allocation3 + $0x89] sm:$0x1] %vm1004, %v1023
      %1034 = vst.msk [vmem:[#allocation3 + $0x99] sm:$0x1] %vm1004, %v1024
      %v1035 = vld [vmem:[#allocation3] sm:$0xff]
      %v1036 = vld [vmem:[#allocation3 + $0x10] sm:$0xff]
      %v1037 = vld [vmem:[#allocation3 + $0x20] sm:$0xff]
      %v1038 = vld [vmem:[#allocation3 + $0x30] sm:$0xff]
      %v1039 = vld [vmem:[#allocation3 + $0x40] sm:$0xff]
      %v1040 = vld [vmem:[#allocation3 + $0x50] sm:$0xff]
      %v1041 = vld [vmem:[#allocation3 + $0x60] sm:$0xff]
      %v1042 = vld [vmem:[#allocation3 + $0x70] sm:$0xff]
      %v1043 = vld [vmem:[#allocation3 + $0x1] sm:$0xff]
      %v1044 = vld [vmem:[#allocation3 + $0x11] sm:$0xff]
      %v1045 = vld [vmem:[#allocation3 + $0x21] sm:$0xff]
      %v1046 = vld [vmem:[#allocation3 + $0x31] sm:$0xff]
      %v1047 = vld [vmem:[#allocation3 + $0x41] sm:$0xff]
      %v1048 = vld [vmem:[#allocation3 + $0x51] sm:$0xff]
      %v1049 = vld [vmem:[#allocation3 + $0x61] sm:$0xff]
      %v1050 = vld [vmem:[#allocation3 + $0x71] sm:$0xff]
      %v1051 = vld [vmem:[#allocation3 + $0x2] sm:$0xff]
      %v1052 = vld [vmem:[#allocation3 + $0x12] sm:$0xff]
      %v1053 = vld [vmem:[#allocation3 + $0x22] sm:$0xff]
      %v1054 = vld [vmem:[#allocation3 + $0x32] sm:$0xff]
      %v1055 = vld [vmem:[#allocation3 + $0x42] sm:$0xff]
      %v1056 = vld [vmem:[#allocation3 + $0x52] sm:$0xff]
      %v1057 = vld [vmem:[#allocation3 + $0x62] sm:$0xff]
      %v1058 = vld [vmem:[#allocation3 + $0x72] sm:$0xff]
      %v1059 = vld [vmem:[%s982] sm:$0xff]
      %v1060 = vld [vmem:[%s982 + $0x10] sm:$0xff]
      %v1061 = vld [vmem:[%s982 + $0x20] sm:$0xff]
      %v1062 = vld [vmem:[%s982 + $0x30] sm:$0xff]
      %v1063 = vld [vmem:[%s982 + $0x40] sm:$0xff]
      %v1064 = vld [vmem:[%s982 + $0x50] sm:$0xff]
      %v1065 = vld [vmem:[%s982 + $0x60] sm:$0xff]
      %v1066 = vld [vmem:[%s982 + $0x70] sm:$0xff]
      %v1067 = vld [vmem:[%s982 + $0x1] sm:$0xff]
      %v1068 = vld [vmem:[%s982 + $0x11] sm:$0xff]
      %v1069 = vld [vmem:[%s982 + $0x21] sm:$0xff]
      %v1070 = vld [vmem:[%s982 + $0x31] sm:$0xff]
      %v1071 = vld [vmem:[%s982 + $0x41] sm:$0xff]
      %v1072 = vld [vmem:[%s982 + $0x51] sm:$0xff]
      %v1073 = vld [vmem:[%s982 + $0x61] sm:$0xff]
      %v1074 = vld [vmem:[%s982 + $0x71] sm:$0xff]
      %v1075 = vld [vmem:[%s982 + $0x2] sm:$0xff]
      %v1076 = vld [vmem:[%s982 + $0x12] sm:$0xff]
      %v1077 = vld [vmem:[%s982 + $0x22] sm:$0xff]
      %v1078 = vld [vmem:[%s982 + $0x32] sm:$0xff]
      %v1079 = vld [vmem:[%s982 + $0x42] sm:$0xff]
      %v1080 = vld [vmem:[%s982 + $0x52] sm:$0xff]
      %v1081 = vld [vmem:[%s982 + $0x62] sm:$0xff]
      %v1082 = vld [vmem:[%s982 + $0x72] sm:$0xff]
      %s1083 = scalar_lea.vmem [#allocation3], 32
      %v1084 = vld [vmem:[%s1083] sm:$0xff]
      %v1085 = vld [vmem:[%s1083 + $0x10] sm:$0xff]
      %v1086 = vld [vmem:[%s1083 + $0x20] sm:$0xff]
      %v1087 = vld [vmem:[%s1083 + $0x30] sm:$0xff]
      %v1088 = vld [vmem:[%s1083 + $0x40] sm:$0xff]
      %v1089 = vld [vmem:[%s1083 + $0x50] sm:$0xff]
      %v1090 = vld [vmem:[%s1083 + $0x60] sm:$0xff]
      %v1091 = vld [vmem:[%s1083 + $0x70] sm:$0xff]
      %v1092 = vld [vmem:[%s1083 + $0x1] sm:$0xff]
      %v1093 = vld [vmem:[%s1083 + $0x11] sm:$0xff]
      %v1094 = vld [vmem:[%s1083 + $0x21] sm:$0xff]
      %v1095 = vld [vmem:[%s1083 + $0x31] sm:$0xff]
      %v1096 = vld [vmem:[%s1083 + $0x41] sm:$0xff]
      %v1097 = vld [vmem:[%s1083 + $0x51] sm:$0xff]
      %v1098 = vld [vmem:[%s1083 + $0x61] sm:$0xff]
      %v1099 = vld [vmem:[%s1083 + $0x71] sm:$0xff]
      %v1100 = vld [vmem:[%s1083 + $0x2] sm:$0xff]
      %v1101 = vld [vmem:[%s1083 + $0x12] sm:$0xff]
      %v1102 = vld [vmem:[%s1083 + $0x22] sm:$0xff]
      %v1103 = vld [vmem:[%s1083 + $0x32] sm:$0xff]
      %v1104 = vld [vmem:[%s1083 + $0x42] sm:$0xff]
      %v1105 = vld [vmem:[%s1083 + $0x52] sm:$0xff]
      %v1106 = vld [vmem:[%s1083 + $0x62] sm:$0xff]
      %v1107 = vld [vmem:[%s1083 + $0x72] sm:$0xff]
      %1116 = vrot.lane.b32.xlu0 %v1043, 8
      %v1117 = vpop.permute.xlu0 %1116
      %1118 = vrot.lane.b32.xlu0 %v1044, 8
      %v1119 = vpop.permute.xlu0 %1118
      %1120 = vrot.lane.b32.xlu0 %v1045, 8
      %v1121 = vpop.permute.xlu0 %1120
      %1122 = vrot.lane.b32.xlu0 %v1046, 8
      %v1123 = vpop.permute.xlu0 %1122
      %1124 = vrot.lane.b32.xlu0 %v1047, 8
      %v1125 = vpop.permute.xlu0 %1124
      %1126 = vrot.lane.b32.xlu0 %v1048, 8
      %v1127 = vpop.permute.xlu0 %1126
      %1128 = vrot.lane.b32.xlu0 %v1049, 8
      %v1129 = vpop.permute.xlu0 %1128
      %1130 = vrot.lane.b32.xlu0 %v1050, 8
      %v1131 = vpop.permute.xlu0 %1130
      %1148 = vrot.lane.b32.xlu0 %v1051, 16
      %v1149 = vpop.permute.xlu0 %1148
      %1150 = vrot.lane.b32.xlu0 %v1052, 16
      %v1151 = vpop.permute.xlu0 %1150
      %1152 = vrot.lane.b32.xlu0 %v1053, 16
      %v1153 = vpop.permute.xlu0 %1152
      %1154 = vrot.lane.b32.xlu0 %v1054, 16
      %v1155 = vpop.permute.xlu0 %1154
      %1156 = vrot.lane.b32.xlu0 %v1055, 16
      %v1157 = vpop.permute.xlu0 %1156
      %1158 = vrot.lane.b32.xlu0 %v1056, 16
      %v1159 = vpop.permute.xlu0 %1158
      %1160 = vrot.lane.b32.xlu0 %v1057, 16
      %v1161 = vpop.permute.xlu0 %1160
      %1162 = vrot.lane.b32.xlu0 %v1058, 16
      %v1163 = vpop.permute.xlu0 %1162
      %1180 = vrot.lane.b32.xlu0 %v1059, 24
      %v1181 = vpop.permute.xlu0 %1180
      %1182 = vrot.lane.b32.xlu0 %v1060, 24
      %v1183 = vpop.permute.xlu0 %1182
      %1184 = vrot.lane.b32.xlu0 %v1061, 24
      %v1185 = vpop.permute.xlu0 %1184
      %1186 = vrot.lane.b32.xlu0 %v1062, 24
      %v1187 = vpop.permute.xlu0 %1186
      %1188 = vrot.lane.b32.xlu0 %v1063, 24
      %v1189 = vpop.permute.xlu0 %1188
      %1190 = vrot.lane.b32.xlu0 %v1064, 24
      %v1191 = vpop.permute.xlu0 %1190
      %1192 = vrot.lane.b32.xlu0 %v1065, 24
      %v1193 = vpop.permute.xlu0 %1192
      %1194 = vrot.lane.b32.xlu0 %v1066, 24
      %v1195 = vpop.permute.xlu0 %1194
      %1212 = vrot.lane.b32.xlu0 %v1067, 32
      %v1213 = vpop.permute.xlu0 %1212
      %1214 = vrot.lane.b32.xlu0 %v1068, 32
      %v1215 = vpop.permute.xlu0 %1214
      %1216 = vrot.lane.b32.xlu0 %v1069, 32
      %v1217 = vpop.permute.xlu0 %1216
      %1218 = vrot.lane.b32.xlu0 %v1070, 32
      %v1219 = vpop.permute.xlu0 %1218
      %1220 = vrot.lane.b32.xlu0 %v1071, 32
      %v1221 = vpop.permute.xlu0 %1220
      %1222 = vrot.lane.b32.xlu0 %v1072, 32
      %v1223 = vpop.permute.xlu0 %1222
      %1224 = vrot.lane.b32.xlu0 %v1073, 32
      %v1225 = vpop.permute.xlu0 %1224
      %1226 = vrot.lane.b32.xlu0 %v1074, 32
      %v1227 = vpop.permute.xlu0 %1226
      %1244 = vrot.lane.b32.xlu0 %v1075, 40
      %v1245 = vpop.permute.xlu0 %1244
      %1246 = vrot.lane.b32.xlu0 %v1076, 40
      %v1247 = vpop.permute.xlu0 %1246
      %1248 = vrot.lane.b32.xlu0 %v1077, 40
      %v1249 = vpop.permute.xlu0 %1248
      %1250 = vrot.lane.b32.xlu0 %v1078, 40
      %v1251 = vpop.permute.xlu0 %1250
      %1252 = vrot.lane.b32.xlu0 %v1079, 40
      %v1253 = vpop.permute.xlu0 %1252
      %1254 = vrot.lane.b32.xlu0 %v1080, 40
      %v1255 = vpop.permute.xlu0 %1254
      %1256 = vrot.lane.b32.xlu0 %v1081, 40
      %v1257 = vpop.permute.xlu0 %1256
      %1258 = vrot.lane.b32.xlu0 %v1082, 40
      %v1259 = vpop.permute.xlu0 %1258
      %1276 = vrot.lane.b32.xlu0 %v1084, 48
      %v1277 = vpop.permute.xlu0 %1276
      %1278 = vrot.lane.b32.xlu0 %v1085, 48
      %v1279 = vpop.permute.xlu0 %1278
      %1280 = vrot.lane.b32.xlu0 %v1086, 48
      %v1281 = vpop.permute.xlu0 %1280
      %1282 = vrot.lane.b32.xlu0 %v1087, 48
      %v1283 = vpop.permute.xlu0 %1282
      %1284 = vrot.lane.b32.xlu0 %v1088, 48
      %v1285 = vpop.permute.xlu0 %1284
      %1286 = vrot.lane.b32.xlu0 %v1089, 48
      %v1287 = vpop.permute.xlu0 %1286
      %1288 = vrot.lane.b32.xlu0 %v1090, 48
      %v1289 = vpop.permute.xlu0 %1288
      %1290 = vrot.lane.b32.xlu0 %v1091, 48
      %v1291 = vpop.permute.xlu0 %1290
      %1308 = vrot.lane.b32.xlu0 %v1092, 56
      %v1309 = vpop.permute.xlu0 %1308
      %1310 = vrot.lane.b32.xlu0 %v1093, 56
      %v1311 = vpop.permute.xlu0 %1310
      %1312 = vrot.lane.b32.xlu0 %v1094, 56
      %v1313 = vpop.permute.xlu0 %1312
      %1314 = vrot.lane.b32.xlu0 %v1095, 56
      %v1315 = vpop.permute.xlu0 %1314
      %1316 = vrot.lane.b32.xlu0 %v1096, 56
      %v1317 = vpop.permute.xlu0 %1316
      %1318 = vrot.lane.b32.xlu0 %v1097, 56
      %v1319 = vpop.permute.xlu0 %1318
      %1320 = vrot.lane.b32.xlu0 %v1098, 56
      %v1321 = vpop.permute.xlu0 %1320
      %1322 = vrot.lane.b32.xlu0 %v1099, 56
      %v1323 = vpop.permute.xlu0 %1322
      %1340 = vrot.lane.b32.xlu0 %v1100, 64
      %v1341 = vpop.permute.xlu0 %1340
      %1342 = vrot.lane.b32.xlu0 %v1101, 64
      %v1343 = vpop.permute.xlu0 %1342
      %1344 = vrot.lane.b32.xlu0 %v1102, 64
      %v1345 = vpop.permute.xlu0 %1344
      %1346 = vrot.lane.b32.xlu0 %v1103, 64
      %v1347 = vpop.permute.xlu0 %1346
      %1348 = vrot.lane.b32.xlu0 %v1104, 64
      %v1349 = vpop.permute.xlu0 %1348
      %1350 = vrot.lane.b32.xlu0 %v1105, 64
      %v1351 = vpop.permute.xlu0 %1350
      %1352 = vrot.lane.b32.xlu0 %v1106, 64
      %v1353 = vpop.permute.xlu0 %1352
      %1354 = vrot.lane.b32.xlu0 %v1107, 64
      %v1355 = vpop.permute.xlu0 %1354
      %v1364 = vsel %vm775, %v1035, %v1117
      %v1365 = vsel %vm775, %v1036, %v1119
      %v1366 = vsel %vm775, %v1037, %v1121
      %v1367 = vsel %vm775, %v1038, %v1123
      %v1368 = vsel %vm775, %v1039, %v1125
      %v1369 = vsel %vm775, %v1040, %v1127
      %v1370 = vsel %vm775, %v1041, %v1129
      %v1371 = vsel %vm775, %v1042, %v1131
      %v1372 = vsel %vm793, %v1364, %v1149
      %v1373 = vsel %vm793, %v1365, %v1151
      %v1374 = vsel %vm793, %v1366, %v1153
      %v1375 = vsel %vm793, %v1367, %v1155
      %v1376 = vsel %vm793, %v1368, %v1157
      %v1377 = vsel %vm793, %v1369, %v1159
      %v1378 = vsel %vm793, %v1370, %v1161
      %v1379 = vsel %vm793, %v1371, %v1163
      %v1380 = vsel %vm811, %v1372, %v1181
      %v1381 = vsel %vm811, %v1373, %v1183
      %v1382 = vsel %vm811, %v1374, %v1185
      %v1383 = vsel %vm811, %v1375, %v1187
      %v1384 = vsel %vm811, %v1376, %v1189
      %v1385 = vsel %vm811, %v1377, %v1191
      %v1386 = vsel %vm811, %v1378, %v1193
      %v1387 = vsel %vm811, %v1379, %v1195
      %v1388 = vsel %vm829, %v1380, %v1213
      %v1389 = vsel %vm829, %v1381, %v1215
      %v1390 = vsel %vm829, %v1382, %v1217
      %v1391 = vsel %vm829, %v1383, %v1219
      %v1392 = vsel %vm829, %v1384, %v1221
      %v1393 = vsel %vm829, %v1385, %v1223
      %v1394 = vsel %vm829, %v1386, %v1225
      %v1395 = vsel %vm829, %v1387, %v1227
      %vm1396 = vcmask 326656
      %v1397 = vsel %vm1396, %v1388, %v1245
      %v1398 = vsel %vm1396, %v1389, %v1247
      %v1399 = vsel %vm1396, %v1390, %v1249
      %v1400 = vsel %vm1396, %v1391, %v1251
      %v1401 = vsel %vm1396, %v1392, %v1253
      %v1402 = vsel %vm1396, %v1393, %v1255
      %v1403 = vsel %vm1396, %v1394, %v1257
      %v1404 = vsel %vm1396, %v1395, %v1259
      %vm1405 = vcmask 392192
      %v1406 = vsel %vm1405, %v1397, %v1277
      %v1407 = vsel %vm1405, %v1398, %v1279
      %v1408 = vsel %vm1405, %v1399, %v1281
      %v1409 = vsel %vm1405, %v1400, %v1283
      %v1410 = vsel %vm1405, %v1401, %v1285
      %v1411 = vsel %vm1405, %v1402, %v1287
      %v1412 = vsel %vm1405, %v1403, %v1289
      %v1413 = vsel %vm1405, %v1404, %v1291
      %vm1414 = vcmask 457728
      %v1415 = vsel %vm1414, %v1406, %v1309
      %v1416 = vsel %vm1414, %v1407, %v1311
      %v1417 = vsel %vm1414, %v1408, %v1313
      %v1418 = vsel %vm1414, %v1409, %v1315
      %v1419 = vsel %vm1414, %v1410, %v1317
      %v1420 = vsel %vm1414, %v1411, %v1319
      %v1421 = vsel %vm1414, %v1412, %v1321
      %v1422 = vsel %vm1414, %v1413, %v1323
      %vm1423 = vcmask 523264
      %v1424 = vsel %vm1423, %v1415, %v1341
      %v1425 = vsel %vm1423, %v1416, %v1343
      %v1426 = vsel %vm1423, %v1417, %v1345
      %v1427 = vsel %vm1423, %v1418, %v1347
      %v1428 = vsel %vm1423, %v1419, %v1349
      %v1429 = vsel %vm1423, %v1420, %v1351
      %v1430 = vsel %vm1423, %v1421, %v1353
      %v1431 = vsel %vm1423, %v1422, %v1355
      %v1432 = vpack.c.bf16 %v1425, %v1424
      %v1433 = vpack.c.bf16 %v1427, %v1426
      %v1434 = vpack.c.bf16 %v1429, %v1428
      %v1435 = vpack.c.bf16 %v1431, %v1430
      %v1436 = vld [vmem:[%s4] sm:$0xf]
      %v1437 = vld [vmem:[%s4 + $0x4] sm:$0xf]
      %v1438 = vld [vmem:[%s4 + $0x8] sm:$0xf]
      %v1439 = vld [vmem:[%s4 + $0xc] sm:$0xf]
      %v1440 = vld [vmem:[%s4 + $0x10] sm:$0xf]
      %v1441 = vld [vmem:[%s4 + $0x14] sm:$0xf]
      %v1442 = vld [vmem:[%s4 + $0x18] sm:$0xf]
      %v1443 = vld [vmem:[%s4 + $0x1c] sm:$0xf]
      %v1444 = vld [vmem:[%s4 + $0x20] sm:$0xf]
      %v1454 = vunpack.c.l.b16 %v1436
      %v1455 = vunpack.c.l.b16 %v1437
      %v1456 = vunpack.c.l.b16 %v1438
      %v1457 = vunpack.c.l.b16 %v1439
      %v1458 = vunpack.c.l.b16 %v1440
      %v1459 = vunpack.c.l.b16 %v1441
      %v1460 = vunpack.c.l.b16 %v1442
      %v1461 = vunpack.c.l.b16 %v1443
      %v1462 = vunpack.c.l.b16 %v1444
      %v1463 = vpack.c.b16 %v1455, %v1454
      %v1464 = vpack.c.b16 %v1457, %v1456
      %v1465 = vpack.c.b16 %v1459, %v1458
      %v1466 = vpack.c.b16 %v1461, %v1460
      %v1467 = vpack.c.b16 %v1462, %v1462
      %vm1472 = vcmask 588800
      %v1474 = vsel %vm1472, %v1432, 0
      %v1477 = vsel %vm1472, %v1433, 0
      %v1480 = vsel %vm1472, %v1434, 0
      %v1483 = vsel %vm1472, %v1435, 0
      %vm1485 = vcmask 1043456
      %v1487 = vsel %vm1485, %v1467, 0
      %1489 = vmatprep.subr.bf16.mxu0 0
      %1490 = vmatpush1.bf16.msra.mxu0 0
      %1491 = vmatprep.subr.bf16.mxu0 0
      %1492 = vmatpush1.bf16.msra.mxu0 0
      %1493 = vmatprep.subr.bf16.mxu0 0
      %1494 = vmatpush1.bf16.msra.mxu0 0
      %1495 = vmatprep.subr.bf16.mxu0 0
      %1496 = vmatpush1.bf16.msra.mxu0 %v1487
      %1497 = vmatprep.subr.bf16.mxu0 0
      %1498 = vmatpush1.bf16.msra.mxu0 %v1466
      %1499 = vmatprep.subr.bf16.mxu0 0
      %1500 = vmatpush1.bf16.msra.mxu0 %v1465
      %1501 = vmatprep.subr.bf16.mxu0 0
      %1502 = vmatpush1.bf16.msra.mxu0 %v1464
      %1503 = vmatprep.subr.bf16.mxu0 0
      %1504 = vmatpush1.bf16.msra.mxu0 %v1463
      %1505 = vmatprep.subr.bf16.mxu0 0
      %1506 = vmatpush2.bf16.msra.mxu0 0
      %1507 = vmatprep.subr.bf16.mxu0 0
      %1508 = vmatpush2.bf16.msra.mxu0 0
      %1509 = vmatprep.subr.bf16.mxu0 0
      %1510 = vmatpush2.bf16.msra.mxu0 0
      %1511 = vmatprep.subr.bf16.mxu0 0
      %1512 = vmatpush2.bf16.msra.mxu0 0
      %1513 = vmatprep.subr.bf16.mxu0 0
      %1514 = vmatpush2.bf16.msra.mxu0 0
      %1515 = vmatprep.subr.bf16.mxu0 0
      %1516 = vmatpush2.bf16.msra.mxu0 0
      %1517 = vmatprep.subr.bf16.mxu0 0
      %1518 = vmatpush2.bf16.msra.mxu0 0
      %1519 = vmatprep.subr.bf16.mxu0 0
      %1520 = vmatpush2.bf16.msra.mxu0 0
      %1521 = vmatprep.mubr.bf16.mxu0 0
      %1522 = vmatmul.mubr.bf16.gmra.mxu0 %v1474
      %v1523 = vpop.f32.mrf.mxu0
      %v1524 = vadd.f32 0.0, %v1523
      %v1525 = vpop.f32.mrf.mxu0
      %v1526 = vpop.f32.mrf.mxu0
      %v1527 = vadd.f32 0.0, %v1526
      %v1528 = vpop.f32.mrf.mxu0
      %1529 = vmatprep.mubr.bf16.mxu0 0
      %1530 = vmatmul.mubr.bf16.gmra.mxu0 %v1477
      %v1531 = vpop.f32.mrf.mxu0
      %v1532 = vadd.f32 0.0, %v1531
      %v1533 = vpop.f32.mrf.mxu0
      %v1534 = vpop.f32.mrf.mxu0
      %v1535 = vadd.f32 0.0, %v1534
      %v1536 = vpop.f32.mrf.mxu0
      %1537 = vmatprep.mubr.bf16.mxu0 0
      %1538 = vmatmul.mubr.bf16.gmra.mxu0 %v1480
      %v1539 = vpop.f32.mrf.mxu0
      %v1540 = vadd.f32 0.0, %v1539
      %v1541 = vpop.f32.mrf.mxu0
      %v1542 = vpop.f32.mrf.mxu0
      %v1543 = vadd.f32 0.0, %v1542
      %v1544 = vpop.f32.mrf.mxu0
      %1545 = vmatprep.mubr.bf16.mxu0 0
      %1546 = vmatmul.mubr.bf16.gmra.mxu0 %v1483
      %v1547 = vpop.f32.mrf.mxu0
      %v1548 = vadd.f32 0.0, %v1547
      %v1549 = vpop.f32.mrf.mxu0
      %v1550 = vpop.f32.mrf.mxu0
      %v1551 = vadd.f32 0.0, %v1550
      %v1552 = vpop.f32.mrf.mxu0
      %1553 = vdwg.mxu0
      %v1554 = vld [vmem:[%s5] sm:$0x1]
      %v1556 = vlaneseq
      %v1557 = vshrl.u32 %v1556, 7
      %v1558 = vsub.s32 0, %v1557
      %v1559 = vrot.slane %v1554, %v1558
      %v1561 = vmul.f32 %v1524, %v1559
      %v1562 = vmul.f32 %v1527, %v1559
      %v1563 = vmul.f32 %v1532, %v1559
      %v1564 = vmul.f32 %v1535, %v1559
      %v1565 = vmul.f32 %v1540, %v1559
      %v1566 = vmul.f32 %v1543, %v1559
      %v1567 = vmul.f32 %v1548, %v1559
      %v1568 = vmul.f32 %v1551, %v1559
      %v1569 = vld [vmem:[%s6] sm:$0x1]
      %v1571 = vlaneseq
      %v1572 = vshrl.u32 %v1571, 7
      %v1573 = vsub.s32 0, %v1572
      %v1574 = vrot.slane %v1569, %v1573
      %v1576 = vadd.f32 %v1561, %v1574
      %v1577 = vadd.f32 %v1562, %v1574
      %v1578 = vadd.f32 %v1563, %v1574
      %v1579 = vadd.f32 %v1564, %v1574
      %v1580 = vadd.f32 %v1565, %v1574
      %v1581 = vadd.f32 %v1566, %v1574
      %v1582 = vadd.f32 %v1567, %v1574
      %v1583 = vadd.f32 %v1568, %v1574
      %v1584 = vmax.f32 %v1576, 0.0
      %v1585 = vmax.f32 %v1577, 0.0
      %v1586 = vmax.f32 %v1578, 0.0
      %v1587 = vmax.f32 %v1579, 0.0
      %v1588 = vmax.f32 %v1580, 0.0
      %v1589 = vmax.f32 %v1581, 0.0
      %v1590 = vmax.f32 %v1582, 0.0
      %v1591 = vmax.f32 %v1583, 0.0
      %1592 = vst.msk [vmem:[%s278] sm:$0xff] %vm775, %v1584
      %1593 = vst.msk [vmem:[%s278 + $0x8] sm:$0xff] %vm775, %v1585
      %1594 = vst.msk [vmem:[%s278 + $0x10] sm:$0xff] %vm775, %v1586
      %1595 = vst.msk [vmem:[%s278 + $0x18] sm:$0xff] %vm775, %v1587
      %1596 = vst.msk [vmem:[%s278 + $0x20] sm:$0xff] %vm775, %v1588
      %1597 = vst.msk [vmem:[%s278 + $0x28] sm:$0xff] %vm775, %v1589
      %1598 = vst.msk [vmem:[%s278 + $0x30] sm:$0xff] %vm775, %v1590
      %1599 = vst.msk [vmem:[%s278 + $0x38] sm:$0xff] %vm775, %v1591
      %p1600 = scmp.lt.s32.totalorder %s18, 1
      %s1601 = scalar_select %p1600, %s18, 1
      %s1602 = smul.addr %s1601, 8
      %s1603 = smul.addr %s1602, 8
      %s1604 = scalar_lea.vmem %s7, %s1603
      // Predicated region
      $region49: #{tpu_custom_call.1} parent=47 // pred_check
        %p1605 = pneg %p188
      $region50: #{tpu_custom_call.1} parent=47 // pred_check_branch
        %1607 = sbr.rel (%p1605) target = $region52
      $region51: #{tpu_custom_call.1} parent=47 // pred_region
        _
      $region52: #{tpu_custom_call.1} parent=47 // pred_fallthru
        _
    $region48: #{tpu_custom_call.1} parent=5 // pred_fallthru
      _
    %p1608 = scmp.le.s32.totalorder 2, %s13
    // Predicated region
    $region53: #{tpu_custom_call.1} parent=5 // pred_check
      %p1609 = pneg %p1608
    $region54: #{tpu_custom_call.1} parent=5 // pred_check_branch
      %1611 = sbr.rel (%p1609) target = $region56
    $region55: #{tpu_custom_call.1} parent=5 // pred_region
      %s1612 = ssub.s32 %s13, 2
      // Predicated region
      $region57: #{tpu_custom_call.1} parent=55 // pred_check
        %p1613 = pneg %p194
      $region58: #{tpu_custom_call.1} parent=55 // pred_check_branch
        %1615 = sbr.rel (%p1613) target = $region60
      $region59: #{tpu_custom_call.1} parent=55 // pred_region
        %p1616 = scmp.lt.s32.totalorder %s19, 1
        %s1617 = scalar_select %p1616, %s19, 1
        %s1618 = smul.addr %s1617, 8
        %s1619 = smul.addr %s1618, 8
        %s1620 = scalar_lea.vmem %s7, %s1619
      $region60: #{tpu_custom_call.1} parent=55 // pred_fallthru
        _
    $region56: #{tpu_custom_call.1} parent=5 // pred_fallthru
      _
  $region6: #{tpu_custom_call.1} parent=0 // loop_footer
    %s17 = sadd.s32 1, %s13
  $region7: #{tpu_custom_call.1} parent=0 // loop_footer_branch
    %12 = sbr.rel target = $region3
  $region8: #{tpu_custom_call.1} parent=0 // loop_exit
    _

</llo_original>
